<compile_context>
chip_gen: v6e
topology: v6e:2x2x1
jax: 0.10.0
libtpu: 0.0.40
codegen_flags: <defaults>
</compile_context>

<pallas_src>
import numpy as np
import jax
import jax.numpy as jnp
from jax.experimental import pallas as pl
from jax.experimental.pallas import tpu as pltpu

C = 192
CR = C // 16          # 12
LRELU_SLOPE = 0.1     # matches nn.LeakyReLU(0.1)

# 32 MiB scoped VMEM is legal on every generation (v5e/v6e: 128 MiB physical,
# v7x: 64 MiB) and large enough for 4096-wide double-buffered f32 tiles.
_VMEM_LIMIT = 32 * 1024 * 1024
# Largest spatial tile (multiple of 128).  f32 worst case per step:
#   in 2x3 MiB + out 2x3 MiB + f32 epilogue temps ~9 MiB  ->  ~21 MiB < 32 MiB.
_MAX_TILE_HW = 4096
# Fused single-pass path keeps one batch's x resident; same budget as one tile.
_FUSED_MAX_HW = 4096


def _lrelu(x):
    # max(x, 0.1*x) == LeakyReLU(0.1) for 0 < slope < 1 (2 VALU ops vs 3 for select).
    return jnp.maximum(x, LRELU_SLOPE * x)


def _sigmoid(z, fast):
    if fast:
        # EUP exp + approx reciprocal: the divide leaves the VALU slot.
        return pl.reciprocal(1.0 + jnp.exp(-z), approx=True)
    return jax.nn.sigmoid(z)


# -----------------------------------------------------------------------------
# Tiled path, kernel 1: per-batch channel sums (numerator of the average pool).
# Grid (B, n_splits, tiles_per_split); the middle axis is a parallel spatial
# split so both v7x TensorCores stay busy even when B is 1 / odd.
# Per step we only do cheap VALU adds into a (C,128) f32 partial; the single
# cross-lane (XLU) reduce happens once, in the last-tile epilogue.
# -----------------------------------------------------------------------------
def _pool_kernel(x_ref, sum_ref, acc_ref):
    t = pl.program_id(2)

    @pl.when(t == 0)
    def _():
        acc_ref[...] = jnp.zeros_like(acc_ref)

    xb = x_ref[0]                                        # (C, tile)
    tile = xb.shape[1]
    part = xb[:, 0:128].astype(jnp.float32)
    for j in range(1, tile // 128):                      # static unroll, VALU only
        part = part + xb[:, j * 128:(j + 1) * 128].astype(jnp.float32)
    acc_ref[...] += part

    @pl.when(t == pl.num_programs(2) - 1)
    def _():
        sum_ref[0, 0] = jnp.sum(acc_ref[...], axis=1, keepdims=True)   # (C, 1)


# -----------------------------------------------------------------------------
# Tiled path, kernel 2: spatial attention + sigmoid fusion + residual.
#   sa  = ws1 (C,C) @ x_tile (C, tile)   -> MXU, lane-dense output
#   conv_s2 (depthwise) and the per-batch channel attention are (C,1) columns
#   broadcast across lanes.
# -----------------------------------------------------------------------------
def _make_sa_kernel(fast_sigmoid, cast_dot_bf16):
    def kernel(x_ref, ws1_ref, ws2d_ref, ca_ref, o_ref):
        xb = x_ref[0]                                                    # (C, T)
        w = ws1_ref[...]
        lhs, rhs = (w, xb)
        if cast_dot_bf16:
            lhs = lhs.astype(jnp.bfloat16)
            rhs = rhs.astype(jnp.bfloat16)
        sa = jnp.dot(lhs, rhs, preferred_element_type=jnp.float32)
        sa = _lrelu(sa)
        z = sa * ws2d_ref[...] + ca_ref[0]                               # (C,1) bcasts
        att = _sigmoid(z, fast_sigmoid)
        o_ref[0] = (xb.astype(jnp.float32) * (att + 1.0)).astype(o_ref.dtype)
    return kernel


# -----------------------------------------------------------------------------
# Fused single-pass kernel (HW fits in VMEM): pool + channel MLP + spatial
# attention + residual from ONE read of x.  The tiny MLP is done with
# broadcast-multiply + axis reductions (avoids M=1 / N=1 MXU drains).
# -----------------------------------------------------------------------------
def _make_fused_kernel(inv_hw, fast_sigmoid, cast_dot_bf16):
    def kernel(x_ref, ws1_ref, wc1t_ref, wc2_ref, ws2d_ref, o_ref):
        xb = x_ref[0]                                                    # (C, HW_pad)

        # Global average pool (padded columns are zeros; divide by the true HW).
        pooled = jnp.sum(xb.astype(jnp.float32), axis=1, keepdims=True) * inv_hw  # (C,1)

        # conv_c1 -> lrelu -> conv_c2, via broadcast + reduce.
        h = jnp.sum(wc1t_ref[...] * pooled, axis=0, keepdims=True)       # (1, CR)
        h = _lrelu(h)
        ca = jnp.sum(wc2_ref[...] * h, axis=1, keepdims=True)            # (C, 1)

        # Spatial attention + fusion.
        lhs, rhs = (ws1_ref[...], xb)
        if cast_dot_bf16:
            lhs = lhs.astype(jnp.bfloat16)
            rhs = rhs.astype(jnp.bfloat16)
        sa = jnp.dot(lhs, rhs, preferred_element_type=jnp.float32)
        sa = _lrelu(sa)
        z = sa * ws2d_ref[...] + ca
        att = _sigmoid(z, fast_sigmoid)
        o_ref[0] = (xb.astype(jnp.float32) * (att + 1.0)).astype(o_ref.dtype)
    return kernel


def _choose_tile(hw_pad128, cap, max_waste_frac=0.08):
    """Largest multiple-of-128 tile <= cap whose ceil-padding waste is small.

    Decouples tile size from divisibility: instead of shrinking the tile so it
    divides HW, we allow padding HW up to the next multiple of the tile as long
    as the extra (zero) bytes stay below `max_waste_frac`.
    """
    for t in range(cap, 127, -128):
        n_tiles = -(-hw_pad128 // t)
        if n_tiles * t - hw_pad128 <= max_waste_frac * hw_pad128:
            return t
    return 128   # unreachable: t=128 always has zero waste


# -----------------------------------------------------------------------------
# Wrapper
# -----------------------------------------------------------------------------
def spatial_channel_attention(x_nchw, wc1, wc2, ws1, ws2_diag, *,
                              compute_dtype=None, out_dtype=None,
                              max_tile_hw=_MAX_TILE_HW,
                              fused_threshold_hw=_FUSED_MAX_HW,
                              cast_dot_to_bf16=False):
    """x_nchw: (B, C, H, W).  Weights (1x1 kernels, spatial dims squeezed):
       wc1: (CR, C)   conv_c1
       wc2: (C, CR)   conv_c2
       ws1: (C, C)    conv_s1
       ws2_diag: (C,) conv_s2 (depthwise, groups=C)

    compute_dtype: dtype used for the HBM-heavy traffic (x, ws1, and by default
      the output).  jnp.bfloat16 roughly halves the bytes on this memory-bound
      kernel; pool accumulation and the MXU accumulate stay f32.
    cast_dot_to_bf16: cast only the MXU operands to bf16 even if HBM I/O is
      f32 (useful on v5e where f32 MXU passes sit near the roofline ridge).
    """
    B, Cin, H, W = x_nchw.shape
    assert Cin == C
    HW = H * W

    compute_dtype = np.dtype(x_nchw.dtype) if compute_dtype is None else np.dtype(compute_dtype)
    out_dtype = compute_dtype if out_dtype is None else np.dtype(out_dtype)
    fast_sigmoid = compute_dtype == np.dtype(jnp.bfloat16)

    # Free contiguous view (no HBM transpose passes): NCHW -> (B, C, HW).
    x = x_nchw.reshape(B, C, HW).astype(compute_dtype)
    ws1_c = ws1.astype(compute_dtype)
    ws2_col = ws2_diag.reshape(C, 1).astype(jnp.float32)
    wc1_f = wc1.astype(jnp.float32)
    wc2_f = wc2.astype(jnp.float32)

    hw128 = ((HW + 127) // 128) * 128
    cap = max(128, (min(int(max_tile_hw), _MAX_TILE_HW) // 128) * 128)

    use_fused = hw128 <= min(int(fused_threshold_hw), _FUSED_MAX_HW)

    if use_fused:
        # ---------- fused single-pass path (one HBM read of x) ----------
        HW_pad = hw128
        if HW_pad != HW:
            x = jnp.pad(x, ((0, 0), (0, 0), (0, HW_pad - HW)))

        out = pl.pallas_call(
            _make_fused_kernel(1.0 / float(HW), fast_sigmoid, cast_dot_to_bf16),
            out_shape=jax.ShapeDtypeStruct((B, C, HW_pad), out_dtype),
            grid_spec=pltpu.PrefetchScalarGridSpec(
                num_scalar_prefetch=0,
                grid=(B,),
                in_specs=[
                    pl.BlockSpec((1, C, HW_pad), lambda b: (b, 0, 0)),
                    pl.BlockSpec((C, C), lambda b: (0, 0)),
                    pl.BlockSpec((C, CR), lambda b: (0, 0)),
                    pl.BlockSpec((C, CR), lambda b: (0, 0)),
                    pl.BlockSpec((C, 1), lambda b: (0, 0)),
                ],
                out_specs=pl.BlockSpec((1, C, HW_pad), lambda b: (b, 0, 0)),
            ),
            compiler_params=pltpu.CompilerParams(
                dimension_semantics=("parallel",),
                vmem_limit_bytes=_VMEM_LIMIT),
        )(x, ws1_c, wc1_f.T, wc2_f, ws2_col)
    else:
        # ---------- tiled streaming path (large HW) ----------
        tile = _choose_tile(hw128, cap)
        n_tiles = -(-hw128 // tile)
        HW_pad = n_tiles * tile
        if HW_pad != HW:
            x = jnp.pad(x, ((0, 0), (0, 0), (0, HW_pad - HW)))

        # Split the pool reduction in two so v7x's second TensorCore has work
        # even at B=1; harmless on single-TC chips.
        n_splits = 2 if (n_tiles % 2 == 0 and n_tiles >= 2) else 1
        tps = n_tiles // n_splits

        sums = pl.pallas_call(
            _pool_kernel,
            out_shape=jax.ShapeDtypeStruct((B, n_splits, C, 1), jnp.float32),
            grid_spec=pltpu.PrefetchScalarGridSpec(
                num_scalar_prefetch=0,
                grid=(B, n_splits, tps),
                in_specs=[pl.BlockSpec((1, C, tile),
                                       lambda b, s, t: (b, 0, s * tps + t))],
                out_specs=pl.BlockSpec((1, 1, C, 1), lambda b, s, t: (b, s, 0, 0)),
                scratch_shapes=[pltpu.VMEM((C, 128), jnp.float32)],
            ),
            compiler_params=pltpu.CompilerParams(
                dimension_semantics=("parallel", "parallel", "arbitrary"),
                vmem_limit_bytes=_VMEM_LIMIT),
        )(x)

        # Tiny channel-attention MLP, batched over B in plain JAX
        # (zeros in the padded columns don't bias the sum; divide by true HW).
        pooled = jnp.sum(sums, axis=1)[:, :, 0] * (1.0 / float(HW))      # (B, C) f32
        ca = _lrelu(pooled @ wc1_f.T) @ wc2_f.T                          # (B, C)
        ca_col = ca[:, :, None]                                          # (B, C, 1)

        out = pl.pallas_call(
            _make_sa_kernel(fast_sigmoid, cast_dot_to_bf16),
            out_shape=jax.ShapeDtypeStruct((B, C, HW_pad), out_dtype),
            grid_spec=pltpu.PrefetchScalarGridSpec(
                num_scalar_prefetch=0,
                grid=(B, n_tiles),
                in_specs=[
                    pl.BlockSpec((1, C, tile), lambda b, t: (b, 0, t)),
                    pl.BlockSpec((C, C), lambda b, t: (0, 0)),
                    pl.BlockSpec((C, 1), lambda b, t: (0, 0)),
                    pl.BlockSpec((1, C, 1), lambda b, t: (b, 0, 0)),
                ],
                out_specs=pl.BlockSpec((1, C, tile), lambda b, t: (b, 0, t)),
            ),
            compiler_params=pltpu.CompilerParams(
                dimension_semantics=("parallel", "parallel"),
                vmem_limit_bytes=_VMEM_LIMIT),
        )(x, ws1_c, ws2_col, ca_col)

    if HW_pad != HW:
        out = out[:, :, :HW]
    return out.reshape(B, C, H, W)


# -----------------------------------------------------------------------------
# Pure-JAX reference (mirrors the PyTorch forward exactly)
# -----------------------------------------------------------------------------
def reference(x, wc1, wc2, ws1, ws2_diag):
    pooled = jnp.mean(x, axis=(2, 3))                      # (B, C)
    h = _lrelu(pooled @ wc1.T)                             # (B, CR)
    ca = h @ wc2.T                                         # (B, C)
    sa = jnp.einsum('bchw,oc->bohw', x, ws1)
    sa = _lrelu(sa)
    sa = sa * ws2_diag[None, :, None, None]
    att = jax.nn.sigmoid(sa + ca[:, :, None, None])
    return att * x + x


if __name__ == "__main__":
    key = jax.random.PRNGKey(0)
    k_x, k1, k2, k3, k4 = jax.random.split(key, 5)

    B, H, W = 2, 16, 16
    x = jax.random.normal(k_x, (B, C, H, W), dtype=jnp.float32)

    # Deterministic 1x1 conv weights (PyTorch shapes with trailing (1,1) squeezed).
    wc1 = jax.random.normal(k1, (CR, C), dtype=jnp.float32) * 0.05    # conv_c1
    wc2 = jax.random.normal(k2, (C, CR), dtype=jnp.float32) * 0.05    # conv_c2
    ws1 = jax.random.normal(k3, (C, C), dtype=jnp.float32) * 0.05     # conv_s1
    ws2_diag = jax.random.normal(k4, (C,), dtype=jnp.float32) * 0.05  # conv_s2

    ref = reference(x, wc1, wc2, ws1, ws2_diag)

    # 1) Fused single-pass path (HW fits in VMEM), f32 I/O -> tight tolerance.
    out_fused = jax.block_until_ready(
        spatial_channel_attention(x, wc1, wc2, ws1, ws2_diag))
    assert out_fused.shape == (B, C, H, W)
    err = float(jnp.max(jnp.abs(out_fused - ref)))
    assert jnp.allclose(out_fused, ref, atol=1e-4, rtol=1e-4), err

    # 2) Tiled two-kernel streaming path (forced), f32 I/O -> tight tolerance.
    out_tiled = jax.block_until_ready(
        spatial_channel_attention(x, wc1, wc2, ws1, ws2_diag, fused_threshold_hw=0))
    err = float(jnp.max(jnp.abs(out_tiled - ref)))
    assert jnp.allclose(out_tiled, ref, atol=1e-4, rtol=1e-4), err

    # 3) bf16 HBM-I/O fused path -> loose tolerance vs the f32 reference.
    out_bf16 = jax.block_until_ready(
        spatial_channel_attention(x, wc1, wc2, ws1, ws2_diag,
                                  compute_dtype=jnp.bfloat16))
    err = float(jnp.max(jnp.abs(out_bf16.astype(jnp.float32) - ref)))
    assert err < 1e-1, err

    # 4) bf16 HBM-I/O tiled path (forced) -> loose tolerance.
    out_bf16_t = jax.block_until_ready(
        spatial_channel_attention(x, wc1, wc2, ws1, ws2_diag,
                                  compute_dtype=jnp.bfloat16, fused_threshold_hw=0))
    err = float(jnp.max(jnp.abs(out_bf16_t.astype(jnp.float32) - ref)))
    assert err < 1e-1, err

    print("KERNEL_OK")
</pallas_src>

<mosaic_0001>
module attributes {stable_mosaic.version = 11 : i64} {
  func.func @kernel(%arg0: i32, %arg1: memref<1x192x256xf32, #tpu.memory_space<vmem>>, %arg2: memref<192x192xf32, #tpu.memory_space<vmem>>, %arg3: memref<192x12xf32, #tpu.memory_space<vmem>>, %arg4: memref<192x12xf32, #tpu.memory_space<vmem>>, %arg5: memref<192x1xf32, #tpu.memory_space<vmem>>, %arg6: memref<1x192x256xf32, #tpu.memory_space<vmem>>) attributes {dimension_semantics = [#tpu.dimension_semantics<parallel>], iteration_bounds = array<i64: 2>, scalar_prefetch = 0 : i64, scratch_operands = 0 : i64, tpu.core_type = #tpu.core_type<tc>, window_params = [{transform_indices = @transform_0, window_bounds = array<i64: 1, 192, 256>}, {pipeline_mode = #tpu.pipeline_mode<synchronous>, transform_indices = @transform_1, window_bounds = array<i64: 192, 192>}, {pipeline_mode = #tpu.pipeline_mode<synchronous>, transform_indices = @transform_2, window_bounds = array<i64: 192, 12>}, {pipeline_mode = #tpu.pipeline_mode<synchronous>, transform_indices = @transform_3, window_bounds = array<i64: 192, 12>}, {pipeline_mode = #tpu.pipeline_mode<synchronous>, transform_indices = @transform_4, window_bounds = array<i64: 192, 1>}, {transform_indices = @transform_5, window_bounds = array<i64: 1, 192, 256>}]} {
    %c0 = arith.constant 0 : index
    %c0_0 = arith.constant 0 : index
    %c0_1 = arith.constant 0 : index
    %0 = vector.load %arg1[%c0, %c0_0, %c0_1] : memref<1x192x256xf32, #tpu.memory_space<vmem>>, vector<1x192x256xf32>
    %1 = vector.shape_cast %0 : vector<1x192x256xf32> to vector<192x256xf32>
    %cst = arith.constant dense<0.000000e+00> : vector<192xf32>
    %2 = vector.multi_reduction <add>, %1, %cst [1] : vector<192x256xf32> to vector<192xf32>
    %3 = vector.shape_cast %2 : vector<192xf32> to vector<192x1xf32>
    %cst_2 = arith.constant 3.906250e-03 : f32
    %4 = vector.broadcast %cst_2 : f32 to vector<192x1xf32>
    %5 = arith.mulf %3, %4 : vector<192x1xf32>
    %c0_3 = arith.constant 0 : index
    %c0_4 = arith.constant 0 : index
    %6 = vector.load %arg3[%c0_3, %c0_4] : memref<192x12xf32, #tpu.memory_space<vmem>>, vector<192x12xf32>
    %7 = vector.broadcast %5 : vector<192x1xf32> to vector<192x12xf32>
    %8 = arith.mulf %6, %7 : vector<192x12xf32>
    %cst_5 = arith.constant dense<0.000000e+00> : vector<12xf32>
    %9 = vector.multi_reduction <add>, %8, %cst_5 [0] : vector<192x12xf32> to vector<12xf32>
    %10 = vector.shape_cast %9 : vector<12xf32> to vector<1x12xf32>
    %cst_6 = arith.constant 1.000000e-01 : f32
    %11 = vector.broadcast %cst_6 : f32 to vector<1x12xf32>
    %12 = arith.mulf %11, %10 : vector<1x12xf32>
    %13 = arith.maximumf %10, %12 : vector<1x12xf32>
    %c0_7 = arith.constant 0 : index
    %c0_8 = arith.constant 0 : index
    %14 = vector.load %arg4[%c0_7, %c0_8] : memref<192x12xf32, #tpu.memory_space<vmem>>, vector<192x12xf32>
    %15 = vector.broadcast %13 : vector<1x12xf32> to vector<192x12xf32>
    %16 = arith.mulf %14, %15 : vector<192x12xf32>
    %cst_9 = arith.constant dense<0.000000e+00> : vector<192xf32>
    %17 = vector.multi_reduction <add>, %16, %cst_9 [1] : vector<192x12xf32> to vector<192xf32>
    %18 = vector.shape_cast %17 : vector<192xf32> to vector<192x1xf32>
    %c0_10 = arith.constant 0 : index
    %c0_11 = arith.constant 0 : index
    %19 = vector.load %arg2[%c0_10, %c0_11] : memref<192x192xf32, #tpu.memory_space<vmem>>, vector<192x192xf32>
    %cst_12 = arith.constant dense<0.000000e+00> : vector<192x256xf32>
    %20 = tpu.matmul %19, %1, %cst_12 {dimension_numbers = #tpu.dot_dimension_numbers<[1], [0], [0], [1], [0, 0, 1, 1], [], []>} : vector<192x192xf32>, vector<192x256xf32>, vector<192x256xf32> -> vector<192x256xf32>
    %cst_13 = arith.constant 1.000000e-01 : f32
    %21 = vector.broadcast %cst_13 : f32 to vector<192x256xf32>
    %22 = arith.mulf %21, %20 : vector<192x256xf32>
    %23 = arith.maximumf %20, %22 : vector<192x256xf32>
    %c0_14 = arith.constant 0 : index
    %c0_15 = arith.constant 0 : index
    %24 = vector.load %arg5[%c0_14, %c0_15] : memref<192x1xf32, #tpu.memory_space<vmem>>, vector<192x1xf32>
    %25 = vector.broadcast %24 : vector<192x1xf32> to vector<192x256xf32>
    %26 = arith.mulf %23, %25 : vector<192x256xf32>
    %27 = vector.broadcast %18 : vector<192x1xf32> to vector<192x256xf32>
    %28 = arith.addf %26, %27 : vector<192x256xf32>
    %29 = arith.negf %28 : vector<192x256xf32>
    %30 = math.exp %29 : vector<192x256xf32>
    %cst_16 = arith.constant 1.000000e+00 : f32
    %31 = vector.broadcast %cst_16 : f32 to vector<192x256xf32>
    %32 = arith.addf %31, %30 : vector<192x256xf32>
    %33 = arith.divf %31, %32 : vector<192x256xf32>
    %cst_17 = arith.constant 1.000000e+00 : f32
    %34 = vector.broadcast %cst_17 : f32 to vector<192x256xf32>
    %35 = arith.addf %33, %34 : vector<192x256xf32>
    %36 = arith.mulf %1, %35 : vector<192x256xf32>
    %c0_18 = arith.constant 0 : index
    %c0_19 = arith.constant 0 : index
    %c0_20 = arith.constant 0 : index
    %37 = vector.load %arg6[%c0_18, %c0_19, %c0_20] : memref<1x192x256xf32, #tpu.memory_space<vmem>>, vector<1x192x256xf32>
    %38 = vector.shape_cast %37 : vector<1x192x256xf32> to vector<192x256xf32>
    %39 = vector.shape_cast %36 : vector<192x256xf32> to vector<1x192x256xf32>
    tpu.vector_store %arg6[%c0_18, %c0_19, %c0_20], %39 {strides = array<i32>} : memref<1x192x256xf32, #tpu.memory_space<vmem>>, vector<1x192x256xf32>,
    return
  }
  func.func @transform_0(%arg0: i32) -> (i32, i32, i32) {
    %c0_i32 = arith.constant 0 : i32
    %c0_i32_0 = arith.constant 0 : i32
    %c0_i32_1 = arith.constant 0 : i32
    return %arg0, %c0_i32, %c0_i32_0 : i32, i32, i32
  }
  func.func @transform_1(%arg0: i32) -> (i32, i32) {
    %c0_i32 = arith.constant 0 : i32
    %c0_i32_0 = arith.constant 0 : i32
    %c0_i32_1 = arith.constant 0 : i32
    return %c0_i32, %c0_i32_0 : i32, i32
  }
  func.func @transform_2(%arg0: i32) -> (i32, i32) {
    %c0_i32 = arith.constant 0 : i32
    %c0_i32_0 = arith.constant 0 : i32
    %c0_i32_1 = arith.constant 0 : i32
    return %c0_i32, %c0_i32_0 : i32, i32
  }
  func.func @transform_3(%arg0: i32) -> (i32, i32) {
    %c0_i32 = arith.constant 0 : i32
    %c0_i32_0 = arith.constant 0 : i32
    %c0_i32_1 = arith.constant 0 : i32
    return %c0_i32, %c0_i32_0 : i32, i32
  }
  func.func @transform_4(%arg0: i32) -> (i32, i32) {
    %c0_i32 = arith.constant 0 : i32
    %c0_i32_0 = arith.constant 0 : i32
    %c0_i32_1 = arith.constant 0 : i32
    return %c0_i32, %c0_i32_0 : i32, i32
  }
  func.func @transform_5(%arg0: i32) -> (i32, i32, i32) {
    %c0_i32 = arith.constant 0 : i32
    %c0_i32_0 = arith.constant 0 : i32
    %c0_i32_1 = arith.constant 0 : i32
    return %arg0, %c0_i32, %c0_i32_0 : i32, i32, i32
  }
}

</mosaic_0001>

<llo_original>
// kernel: tpu_custom_call.1
$region0: #{tpu_custom_call.1}
  #allocation0 [shape = 'u32[]', space=smem, size = 0x4, offset = 0x4, fixed_abs, tag = 'smem constant byte address 0x4 - core index']
  #allocation1 [shape = 'u32[144,128]{1,0:T(1,128)}', space=vmem, size = 0x12000, scoped, tag = 'internal scratch']
  %s0 = inlined_call_operand.hbm [shape: f32[2,192,256], index: 0, kind: input, shape index: {}]
  %s1 = inlined_call_operand.vmem [shape: f32[192,192], index: 1, kind: input, shape index: {}]
  %s2 = inlined_call_operand.vmem [shape: f32[192,12], index: 2, kind: input, shape index: {}]
  %s3 = inlined_call_operand.vmem [shape: f32[192,12], index: 3, kind: input, shape index: {}]
  %s4 = inlined_call_operand.vmem [shape: f32[192,1], index: 4, kind: input, shape index: {}]
  %s5 = inlined_call_operand.hbm [shape: f32[2,192,256], index: 5, kind: output, shape index: {}]
  %s6 = sld [smem:[#allocation0]]
  $region57: #{tpu_custom_call.1} parent=0
    _
  %s8 = ssub.s32 1, %s6
  %s9 = scalar_select 0, %s8, %s6
  $region1: #{tpu_custom_call.1} parent=0
    #allocation2 [shape = 'u8[393216]{0}', space=vmem, size = 0x60000, scoped, tag = 'input window, operand 0']
    #allocation3 [shape = 's32[2]{0}', space=sflag, size = 0x8, scoped, tag = 'scoped memory for tpu_custom_call.1']
    #allocation4 [shape = 's32[2]{0}', space=sflag, size = 0x8, scoped, tag = 'scoped memory for tpu_custom_call.1']
    #allocation5 [shape = 'u8[393216]{0}', space=vmem, size = 0x60000, scoped, tag = 'output window, operand 0']
    %10 = vsyncpa [#allocation3], 0
    %s11 = scalar_lea.sflag [#allocation3], 1
    %12 = vsyncpa %s11, 0
    %13 = vsyncpa [#allocation4], 0
    %s14 = scalar_lea.sflag [#allocation4], 1
    %15 = vsyncpa %s14, 0
    loop: start=0, step=1, limit=4
    $region2: #{tpu_custom_call.1} parent=1 // loop_pre_header
      _
    $region3: #{tpu_custom_call.1} parent=1 // loop_header
      %s17 = sphi 0, %s21
      %p18 = scmp.ge.s32.totalorder %s17, 4
      %s27 = sphi 0, %s29
      %s30 = sphi 0, %s27
      %s31 = sphi 0, %s30
      %s47 = sphi 0, %s31
      %s51 = sphi 0, %s51
      %s53 = sphi 0, %s51
      %s54 = sphi 0, %s53
      %s68 = sphi 0, %s54
      %s72 = sphi 0, %s72
      %s74 = sphi 0, %s72
      %s75 = sphi 0, %s74
      %s89 = sphi 0, %s75
      %s93 = sphi 0, %s93
      %s95 = sphi 0, %s93
      %s96 = sphi 0, %s95
      %s110 = sphi 0, %s96
      %s114 = sphi 0, %s114
      %s116 = sphi 0, %s114
      %s117 = sphi 0, %s116
      %s131 = sphi 0, %s117
      %s137 = sphi 0, %s139
      %s140 = sphi 0, %s137
      %s141 = sphi 0, %s140
      %s157 = sphi 0, %s141
    $region4: #{tpu_custom_call.1} parent=1 // loop_header_branch
      %20 = sbr.rel (%p18) target = $region8
    $region5: #{tpu_custom_call.1} parent=1 // loop_body
      %s22 = ssub.s32 %s17, 1
      %s23 = ssub.s32 %s17, 2
      %s24 = sadd.s32 %s17, 1
      %s25 = ssub.s32 %s17, %s24
      %p26 = scmp.eq.s32.totalorder %s25, 0
      %s28 = sadd.s32 %s27, 1
      %s29 = scalar_select %p26, %s27, %s28
      %p32 = pneg %p26
      %p33 = scmp.eq.s32.totalorder %s17, 1
      %p34 = por %p32, %p33
      %p35 = scmp.ne.s32.totalorder %s27, %s30
      %p36 = scmp.eq.s32.totalorder %s17, 0
      %p37 = por %p35, %p36
      %p38 = scmp.ne.s32.totalorder %s27, %s30
      %p39 = scmp.eq.s32.totalorder %s22, 1
      %p40 = por %p38, %p39
      %p41 = scmp.ne.s32.totalorder %s30, %s31
      %p42 = scmp.eq.s32.totalorder %s22, 0
      %p43 = por %p41, %p42
      %p44 = scmp.ne.s32.totalorder %s30, %s31
      %p45 = scmp.eq.s32.totalorder %s23, 1
      %p46 = por %p44, %p45
      %p48 = scmp.ne.s32.totalorder %s31, %s47
      %p49 = scmp.eq.s32.totalorder %s23, 0
      %p50 = por %p48, %p49
      %s52 = sadd.s32 %s51, 1
      %p55 = scmp.eq.s32.totalorder %s17, 1
      %p56 = scmp.ne.s32.totalorder %s51, %s53
      %p57 = scmp.eq.s32.totalorder %s17, 0
      %p58 = por %p56, %p57
      %p59 = scmp.ne.s32.totalorder %s51, %s53
      %p60 = scmp.eq.s32.totalorder %s22, 1
      %p61 = por %p59, %p60
      %p62 = scmp.ne.s32.totalorder %s53, %s54
      %p63 = scmp.eq.s32.totalorder %s22, 0
      %p64 = por %p62, %p63
      %p65 = scmp.ne.s32.totalorder %s53, %s54
      %p66 = scmp.eq.s32.totalorder %s23, 1
      %p67 = por %p65, %p66
      %p69 = scmp.ne.s32.totalorder %s54, %s68
      %p70 = scmp.eq.s32.totalorder %s23, 0
      %p71 = por %p69, %p70
      %s73 = sadd.s32 %s72, 1
      %p76 = scmp.eq.s32.totalorder %s17, 1
      %p77 = scmp.ne.s32.totalorder %s72, %s74
      %p78 = scmp.eq.s32.totalorder %s17, 0
      %p79 = por %p77, %p78
      %p80 = scmp.ne.s32.totalorder %s72, %s74
      %p81 = scmp.eq.s32.totalorder %s22, 1
      %p82 = por %p80, %p81
      %p83 = scmp.ne.s32.totalorder %s74, %s75
      %p84 = scmp.eq.s32.totalorder %s22, 0
      %p85 = por %p83, %p84
      %p86 = scmp.ne.s32.totalorder %s74, %s75
      %p87 = scmp.eq.s32.totalorder %s23, 1
      %p88 = por %p86, %p87
      %p90 = scmp.ne.s32.totalorder %s75, %s89
      %p91 = scmp.eq.s32.totalorder %s23, 0
      %p92 = por %p90, %p91
      %s94 = sadd.s32 %s93, 1
      %p97 = scmp.eq.s32.totalorder %s17, 1
      %p98 = scmp.ne.s32.totalorder %s93, %s95
      %p99 = scmp.eq.s32.totalorder %s17, 0
      %p100 = por %p98, %p99
      %p101 = scmp.ne.s32.totalorder %s93, %s95
      %p102 = scmp.eq.s32.totalorder %s22, 1
      %p103 = por %p101, %p102
      %p104 = scmp.ne.s32.totalorder %s95, %s96
      %p105 = scmp.eq.s32.totalorder %s22, 0
      %p106 = por %p104, %p105
      %p107 = scmp.ne.s32.totalorder %s95, %s96
      %p108 = scmp.eq.s32.totalorder %s23, 1
      %p109 = por %p107, %p108
      %p111 = scmp.ne.s32.totalorder %s96, %s110
      %p112 = scmp.eq.s32.totalorder %s23, 0
      %p113 = por %p111, %p112
      %s115 = sadd.s32 %s114, 1
      %p118 = scmp.eq.s32.totalorder %s17, 1
      %p119 = scmp.ne.s32.totalorder %s114, %s116
      %p120 = scmp.eq.s32.totalorder %s17, 0
      %p121 = por %p119, %p120
      %p122 = scmp.ne.s32.totalorder %s114, %s116
      %p123 = scmp.eq.s32.totalorder %s22, 1
      %p124 = por %p122, %p123
      %p125 = scmp.ne.s32.totalorder %s116, %s117
      %p126 = scmp.eq.s32.totalorder %s22, 0
      %p127 = por %p125, %p126
      %p128 = scmp.ne.s32.totalorder %s116, %s117
      %p129 = scmp.eq.s32.totalorder %s23, 1
      %p130 = por %p128, %p129
      %p132 = scmp.ne.s32.totalorder %s117, %s131
      %p133 = scmp.eq.s32.totalorder %s23, 0
      %p134 = por %p132, %p133
      %s135 = ssub.s32 %s17, %s24
      %p136 = scmp.eq.s32.totalorder %s135, 0
      %s138 = sadd.s32 %s137, 1
      %s139 = scalar_select %p136, %s137, %s138
      %p142 = pneg %p136
      %p143 = scmp.eq.s32.totalorder %s17, 1
      %p144 = por %p142, %p143
      %p145 = scmp.ne.s32.totalorder %s137, %s140
      %p146 = scmp.eq.s32.totalorder %s17, 0
      %p147 = por %p145, %p146
      %p148 = scmp.ne.s32.totalorder %s137, %s140
      %p149 = scmp.eq.s32.totalorder %s22, 1
      %p150 = por %p148, %p149
      %p151 = scmp.ne.s32.totalorder %s140, %s141
      %p152 = scmp.eq.s32.totalorder %s22, 0
      %p153 = por %p151, %p152
      %p154 = scmp.ne.s32.totalorder %s140, %s141
      %p155 = scmp.eq.s32.totalorder %s23, 1
      %p156 = por %p154, %p155
      %p158 = scmp.ne.s32.totalorder %s141, %s157
      %p159 = scmp.eq.s32.totalorder %s23, 0
      %p160 = por %p158, %p159
      %p161 = scmp.le.s32.totalorder 1, %s17
      %p162 = scmp.lt.s32.totalorder %s17, 3
      %p163 = pnand %p161, %p162
      %p164 = pneg %p163
      // Predicated region
      $region9: #{tpu_custom_call.1} parent=5 // pred_check
        _
      $region10: #{tpu_custom_call.1} parent=5 // pred_check_branch
        %166 = sbr.rel (%p163) target = $region12
      $region11: #{tpu_custom_call.1} parent=5 // pred_region
        %s167 = ssub.s32 %s17, 1
        // Predicated region
        $region13: #{tpu_custom_call.1} parent=11 // pred_check
          %p168 = pneg %p64
        $region14: #{tpu_custom_call.1} parent=11 // pred_check_branch
          %170 = sbr.rel (%p168) target = $region16
        $region15: #{tpu_custom_call.1} parent=11 // pred_region
          _
        $region16: #{tpu_custom_call.1} parent=11 // pred_fallthru
          _
        // Predicated region
        $region17: #{tpu_custom_call.1} parent=11 // pred_check
          %p171 = pneg %p85
        $region18: #{tpu_custom_call.1} parent=11 // pred_check_branch
          %173 = sbr.rel (%p171) target = $region20
        $region19: #{tpu_custom_call.1} parent=11 // pred_region
          _
        $region20: #{tpu_custom_call.1} parent=11 // pred_fallthru
          _
        // Predicated region
        $region21: #{tpu_custom_call.1} parent=11 // pred_check
          %p174 = pneg %p106
        $region22: #{tpu_custom_call.1} parent=11 // pred_check_branch
          %176 = sbr.rel (%p174) target = $region24
        $region23: #{tpu_custom_call.1} parent=11 // pred_region
          _
        $region24: #{tpu_custom_call.1} parent=11 // pred_fallthru
          _
        // Predicated region
        $region25: #{tpu_custom_call.1} parent=11 // pred_check
          %p177 = pneg %p127
        $region26: #{tpu_custom_call.1} parent=11 // pred_check_branch
          %179 = sbr.rel (%p177) target = $region28
        $region27: #{tpu_custom_call.1} parent=11 // pred_region
          _
        $region28: #{tpu_custom_call.1} parent=11 // pred_fallthru
          _
      $region12: #{tpu_custom_call.1} parent=5 // pred_fallthru
        _
      %p180 = scmp.lt.s32.totalorder %s17, 2
      // Predicated region
      $region29: #{tpu_custom_call.1} parent=5 // pred_check
        %p181 = pneg %p180
      $region30: #{tpu_custom_call.1} parent=5 // pred_check_branch
        %183 = sbr.rel (%p181) target = $region32
      $region31: #{tpu_custom_call.1} parent=5 // pred_region
        // Predicated region
        $region33: #{tpu_custom_call.1} parent=31 // pred_check
          %p184 = pneg %p37
        $region34: #{tpu_custom_call.1} parent=31 // pred_check_branch
          %186 = sbr.rel (%p184) target = $region36
        $region35: #{tpu_custom_call.1} parent=31 // pred_region
          %s187 = sand.u32 %s27, 1
          %s188 = scalar_lea.sflag [#allocation3], %s187
          %s189 = sand.u32 %s27, 1
          %s190 = smul.addr %s189, 384
          %s191 = scalar_lea.vmem [#allocation2], %s190
          %s193 = ssub.s32 6144, 6144
          %194 = vsyncadd %s188, %s193
          %s195 = smul.addr %s17, 48
          %s196 = smul.addr %s195, 128
          %s197 = scalar_lea.hbm %s0, %s196
          %s198 = sshll.u32 %s191, 4
          %s199 = int_to_ptr.vmem [resolvable:$true] %s198
          %204 = dma.hbm_to_vmem [thread:$0]  %s197, 6144, %s199, %s188, 256, 256, 16
        $region36: #{tpu_custom_call.1} parent=31 // pred_fallthru
          _
      $region32: #{tpu_custom_call.1} parent=5 // pred_fallthru
        _
      %p205 = scmp.le.s32.totalorder 1, %s17
      %p206 = scmp.lt.s32.totalorder %s17, 3
      %p207 = pnand %p205, %p206
      %p208 = pneg %p207
      // Predicated region
      $region37: #{tpu_custom_call.1} parent=5 // pred_check
        _
      $region38: #{tpu_custom_call.1} parent=5 // pred_check_branch
        %210 = sbr.rel (%p207) target = $region40
      $region39: #{tpu_custom_call.1} parent=5 // pred_region
        %s211 = ssub.s32 %s17, 1
        %s212 = sand.u32 %s30, 1
        %s213 = scalar_lea.sflag [#allocation3], %s212
        %s214 = sand.u32 %s30, 1
        %s215 = smul.addr %s214, 384
        %s216 = scalar_lea.vmem [#allocation2], %s215
        // Predicated region
        $region41: #{tpu_custom_call.1} parent=39 // pred_check
          %p217 = pneg %p43
        $region42: #{tpu_custom_call.1} parent=39 // pred_check_branch
          %219 = sbr.rel (%p217) target = $region44
        $region43: #{tpu_custom_call.1} parent=39 // pred_region
          %220 = dma.done %s213, 6144
        $region44: #{tpu_custom_call.1} parent=39 // pred_fallthru
          _
        %s221 = sand.u32 %s30, 1
        %s222 = scalar_lea.sflag [#allocation3], %s221
        %s223 = sand.u32 %s30, 1
        %s224 = smul.addr %s223, 384
        %s225 = scalar_lea.vmem [#allocation2], %s224
        %p226 = pneg %p43
        %p227 = pneg %p40
        %p228 = pneg %p64
        %p229 = pneg %p61
        %p230 = pneg %p85
        %p231 = pneg %p82
        %p232 = pneg %p106
        %p233 = pneg %p103
        %p234 = pneg %p127
        %p235 = pneg %p124
        %p236 = pneg %p153
        %p237 = pneg %p150
        %s238 = sand.u32 %s140, 1
        %s239 = scalar_lea.sflag [#allocation4], %s238
        %s240 = sand.u32 %s140, 1
        %s241 = smul.addr %s240, 384
        %s242 = scalar_lea.vmem [#allocation5], %s241
        %v243 = vld [vmem:[%s216] sm:$0xff]
        %v244 = vld [vmem:[%s216 + $0x8] sm:$0xff]
        %v245 = vld [vmem:[%s216 + $0x10] sm:$0xff]
        %v246 = vld [vmem:[%s216 + $0x18] sm:$0xff]
        %v247 = vld [vmem:[%s216 + $0x20] sm:$0xff]
        %v248 = vld [vmem:[%s216 + $0x28] sm:$0xff]
        %v249 = vld [vmem:[%s216 + $0x30] sm:$0xff]
        %v250 = vld [vmem:[%s216 + $0x38] sm:$0xff]
        %v251 = vld [vmem:[%s216 + $0x40] sm:$0xff]
        %v252 = vld [vmem:[%s216 + $0x48] sm:$0xff]
        %v253 = vld [vmem:[%s216 + $0x50] sm:$0xff]
        %v254 = vld [vmem:[%s216 + $0x58] sm:$0xff]
        %v255 = vld [vmem:[%s216 + $0x60] sm:$0xff]
        %v256 = vld [vmem:[%s216 + $0x68] sm:$0xff]
        %v257 = vld [vmem:[%s216 + $0x70] sm:$0xff]
        %v258 = vld [vmem:[%s216 + $0x78] sm:$0xff]
        %v259 = vld [vmem:[%s216 + $0x80] sm:$0xff]
        %v260 = vld [vmem:[%s216 + $0x88] sm:$0xff]
        %v261 = vld [vmem:[%s216 + $0x90] sm:$0xff]
        %v262 = vld [vmem:[%s216 + $0x98] sm:$0xff]
        %v263 = vld [vmem:[%s216 + $0xa0] sm:$0xff]
        %v264 = vld [vmem:[%s216 + $0xa8] sm:$0xff]
        %v265 = vld [vmem:[%s216 + $0xb0] sm:$0xff]
        %v266 = vld [vmem:[%s216 + $0xb8] sm:$0xff]
        %v267 = vld [vmem:[%s216 + $0xc0] sm:$0xff]
        %v268 = vld [vmem:[%s216 + $0xc8] sm:$0xff]
        %v269 = vld [vmem:[%s216 + $0xd0] sm:$0xff]
        %v270 = vld [vmem:[%s216 + $0xd8] sm:$0xff]
        %v271 = vld [vmem:[%s216 + $0xe0] sm:$0xff]
        %v272 = vld [vmem:[%s216 + $0xe8] sm:$0xff]
        %v273 = vld [vmem:[%s216 + $0xf0] sm:$0xff]
        %v274 = vld [vmem:[%s216 + $0xf8] sm:$0xff]
        %v275 = vld [vmem:[%s216 + $0x100] sm:$0xff]
        %v276 = vld [vmem:[%s216 + $0x108] sm:$0xff]
        %v277 = vld [vmem:[%s216 + $0x110] sm:$0xff]
        %v278 = vld [vmem:[%s216 + $0x118] sm:$0xff]
        %v279 = vld [vmem:[%s216 + $0x120] sm:$0xff]
        %v280 = vld [vmem:[%s216 + $0x128] sm:$0xff]
        %v281 = vld [vmem:[%s216 + $0x130] sm:$0xff]
        %v282 = vld [vmem:[%s216 + $0x138] sm:$0xff]
        %v283 = vld [vmem:[%s216 + $0x140] sm:$0xff]
        %v284 = vld [vmem:[%s216 + $0x148] sm:$0xff]
        %v285 = vld [vmem:[%s216 + $0x150] sm:$0xff]
        %v286 = vld [vmem:[%s216 + $0x158] sm:$0xff]
        %v287 = vld [vmem:[%s216 + $0x160] sm:$0xff]
        %v288 = vld [vmem:[%s216 + $0x168] sm:$0xff]
        %v289 = vld [vmem:[%s216 + $0x170] sm:$0xff]
        %v290 = vld [vmem:[%s216 + $0x178] sm:$0xff]
        %v291 = vadd.f32 %v243, %v244
        %292 = vadd.xlane.f32.xlu0 %v291
        %v293 = vpop.xlane.xlu0 %292
        %v294 = vadd.f32 %v245, %v246
        %295 = vadd.xlane.f32.xlu0 %v294
        %v296 = vpop.xlane.xlu0 %295
        %v297 = vadd.f32 %v247, %v248
        %298 = vadd.xlane.f32.xlu0 %v297
        %v299 = vpop.xlane.xlu0 %298
        %v300 = vadd.f32 %v249, %v250
        %301 = vadd.xlane.f32.xlu0 %v300
        %v302 = vpop.xlane.xlu0 %301
        %v303 = vadd.f32 %v251, %v252
        %304 = vadd.xlane.f32.xlu0 %v303
        %v305 = vpop.xlane.xlu0 %304
        %v306 = vadd.f32 %v253, %v254
        %307 = vadd.xlane.f32.xlu0 %v306
        %v308 = vpop.xlane.xlu0 %307
        %v309 = vadd.f32 %v255, %v256
        %310 = vadd.xlane.f32.xlu0 %v309
        %v311 = vpop.xlane.xlu0 %310
        %v312 = vadd.f32 %v257, %v258
        %313 = vadd.xlane.f32.xlu0 %v312
        %v314 = vpop.xlane.xlu0 %313
        %v315 = vadd.f32 %v259, %v260
        %316 = vadd.xlane.f32.xlu0 %v315
        %v317 = vpop.xlane.xlu0 %316
        %v318 = vadd.f32 %v261, %v262
        %319 = vadd.xlane.f32.xlu0 %v318
        %v320 = vpop.xlane.xlu0 %319
        %v321 = vadd.f32 %v263, %v264
        %322 = vadd.xlane.f32.xlu0 %v321
        %v323 = vpop.xlane.xlu0 %322
        %v324 = vadd.f32 %v265, %v266
        %325 = vadd.xlane.f32.xlu0 %v324
        %v326 = vpop.xlane.xlu0 %325
        %v327 = vadd.f32 %v267, %v268
        %328 = vadd.xlane.f32.xlu0 %v327
        %v329 = vpop.xlane.xlu0 %328
        %v330 = vadd.f32 %v269, %v270
        %331 = vadd.xlane.f32.xlu0 %v330
        %v332 = vpop.xlane.xlu0 %331
        %v333 = vadd.f32 %v271, %v272
        %334 = vadd.xlane.f32.xlu0 %v333
        %v335 = vpop.xlane.xlu0 %334
        %v336 = vadd.f32 %v273, %v274
        %337 = vadd.xlane.f32.xlu0 %v336
        %v338 = vpop.xlane.xlu0 %337
        %v339 = vadd.f32 %v275, %v276
        %340 = vadd.xlane.f32.xlu0 %v339
        %v341 = vpop.xlane.xlu0 %340
        %v342 = vadd.f32 %v277, %v278
        %343 = vadd.xlane.f32.xlu0 %v342
        %v344 = vpop.xlane.xlu0 %343
        %v345 = vadd.f32 %v279, %v280
        %346 = vadd.xlane.f32.xlu0 %v345
        %v347 = vpop.xlane.xlu0 %346
        %v348 = vadd.f32 %v281, %v282
        %349 = vadd.xlane.f32.xlu0 %v348
        %v350 = vpop.xlane.xlu0 %349
        %v351 = vadd.f32 %v283, %v284
        %352 = vadd.xlane.f32.xlu0 %v351
        %v353 = vpop.xlane.xlu0 %352
        %v354 = vadd.f32 %v285, %v286
        %355 = vadd.xlane.f32.xlu0 %v354
        %v356 = vpop.xlane.xlu0 %355
        %v357 = vadd.f32 %v287, %v288
        %358 = vadd.xlane.f32.xlu0 %v357
        %v359 = vpop.xlane.xlu0 %358
        %v360 = vadd.f32 %v289, %v290
        %361 = vadd.xlane.f32.xlu0 %v360
        %v362 = vpop.xlane.xlu0 %361
        %v363 = vmul.f32 %v293, 0.00390625
        %v364 = vmul.f32 %v296, 0.00390625
        %v365 = vmul.f32 %v299, 0.00390625
        %v366 = vmul.f32 %v302, 0.00390625
        %v367 = vmul.f32 %v305, 0.00390625
        %v368 = vmul.f32 %v308, 0.00390625
        %v369 = vmul.f32 %v311, 0.00390625
        %v370 = vmul.f32 %v314, 0.00390625
        %v371 = vmul.f32 %v317, 0.00390625
        %v372 = vmul.f32 %v320, 0.00390625
        %v373 = vmul.f32 %v323, 0.00390625
        %v374 = vmul.f32 %v326, 0.00390625
        %v375 = vmul.f32 %v329, 0.00390625
        %v376 = vmul.f32 %v332, 0.00390625
        %v377 = vmul.f32 %v335, 0.00390625
        %v378 = vmul.f32 %v338, 0.00390625
        %v379 = vmul.f32 %v341, 0.00390625
        %v380 = vmul.f32 %v344, 0.00390625
        %v381 = vmul.f32 %v347, 0.00390625
        %v382 = vmul.f32 %v350, 0.00390625
        %v383 = vmul.f32 %v353, 0.00390625
        %v384 = vmul.f32 %v356, 0.00390625
        %v385 = vmul.f32 %v359, 0.00390625
        %v386 = vmul.f32 %v362, 0.00390625
        %v387 = vld [vmem:[%s2] sm:$0xff]
        %v388 = vld [vmem:[%s2 + $0x8] sm:$0xff]
        %v389 = vld [vmem:[%s2 + $0x10] sm:$0xff]
        %v390 = vld [vmem:[%s2 + $0x18] sm:$0xff]
        %v391 = vld [vmem:[%s2 + $0x20] sm:$0xff]
        %v392 = vld [vmem:[%s2 + $0x28] sm:$0xff]
        %v393 = vld [vmem:[%s2 + $0x30] sm:$0xff]
        %v394 = vld [vmem:[%s2 + $0x38] sm:$0xff]
        %v395 = vld [vmem:[%s2 + $0x40] sm:$0xff]
        %v396 = vld [vmem:[%s2 + $0x48] sm:$0xff]
        %v397 = vld [vmem:[%s2 + $0x50] sm:$0xff]
        %v398 = vld [vmem:[%s2 + $0x58] sm:$0xff]
        %v399 = vld [vmem:[%s2 + $0x60] sm:$0xff]
        %v400 = vld [vmem:[%s2 + $0x68] sm:$0xff]
        %v401 = vld [vmem:[%s2 + $0x70] sm:$0xff]
        %v402 = vld [vmem:[%s2 + $0x78] sm:$0xff]
        %v403 = vld [vmem:[%s2 + $0x80] sm:$0xff]
        %v404 = vld [vmem:[%s2 + $0x88] sm:$0xff]
        %v405 = vld [vmem:[%s2 + $0x90] sm:$0xff]
        %v406 = vld [vmem:[%s2 + $0x98] sm:$0xff]
        %v407 = vld [vmem:[%s2 + $0xa0] sm:$0xff]
        %v408 = vld [vmem:[%s2 + $0xa8] sm:$0xff]
        %v409 = vld [vmem:[%s2 + $0xb0] sm:$0xff]
        %v410 = vld [vmem:[%s2 + $0xb8] sm:$0xff]
        %v411 = vmul.f32 %v387, %v363
        %v412 = vmul.f32 %v388, %v364
        %v413 = vmul.f32 %v389, %v365
        %v414 = vmul.f32 %v390, %v366
        %v415 = vmul.f32 %v391, %v367
        %v416 = vmul.f32 %v392, %v368
        %v417 = vmul.f32 %v393, %v369
        %v418 = vmul.f32 %v394, %v370
        %v419 = vmul.f32 %v395, %v371
        %v420 = vmul.f32 %v396, %v372
        %v421 = vmul.f32 %v397, %v373
        %v422 = vmul.f32 %v398, %v374
        %v423 = vmul.f32 %v399, %v375
        %v424 = vmul.f32 %v400, %v376
        %v425 = vmul.f32 %v401, %v377
        %v426 = vmul.f32 %v402, %v378
        %v427 = vmul.f32 %v403, %v379
        %v428 = vmul.f32 %v404, %v380
        %v429 = vmul.f32 %v405, %v381
        %v430 = vmul.f32 %v406, %v382
        %v431 = vmul.f32 %v407, %v383
        %v432 = vmul.f32 %v408, %v384
        %v433 = vmul.f32 %v409, %v385
        %v434 = vmul.f32 %v410, %v386
        %vm435 = vcmask 97280
        %v436 = vsel %vm435, %v411, 0.0
        %v437 = vsel %vm435, %v412, 0.0
        %v438 = vadd.f32 %v436, %v437
        %v439 = vsel %vm435, %v413, 0.0
        %v440 = vadd.f32 %v438, %v439
        %v441 = vsel %vm435, %v414, 0.0
        %v442 = vadd.f32 %v440, %v441
        %v443 = vsel %vm435, %v415, 0.0
        %v444 = vadd.f32 %v442, %v443
        %v445 = vsel %vm435, %v416, 0.0
        %v446 = vadd.f32 %v444, %v445
        %v447 = vsel %vm435, %v417, 0.0
        %v448 = vadd.f32 %v446, %v447
        %v449 = vsel %vm435, %v418, 0.0
        %v450 = vadd.f32 %v448, %v449
        %v451 = vsel %vm435, %v419, 0.0
        %v452 = vadd.f32 %v450, %v451
        %v453 = vsel %vm435, %v420, 0.0
        %v454 = vadd.f32 %v452, %v453
        %v455 = vsel %vm435, %v421, 0.0
        %v456 = vadd.f32 %v454, %v455
        %v457 = vsel %vm435, %v422, 0.0
        %v458 = vadd.f32 %v456, %v457
        %v459 = vsel %vm435, %v423, 0.0
        %v460 = vadd.f32 %v458, %v459
        %v461 = vsel %vm435, %v424, 0.0
        %v462 = vadd.f32 %v460, %v461
        %v463 = vsel %vm435, %v425, 0.0
        %v464 = vadd.f32 %v462, %v463
        %v465 = vsel %vm435, %v426, 0.0
        %v466 = vadd.f32 %v464, %v465
        %v467 = vsel %vm435, %v427, 0.0
        %v468 = vadd.f32 %v466, %v467
        %v469 = vsel %vm435, %v428, 0.0
        %v470 = vadd.f32 %v468, %v469
        %v471 = vsel %vm435, %v429, 0.0
        %v472 = vadd.f32 %v470, %v471
        %v473 = vsel %vm435, %v430, 0.0
        %v474 = vadd.f32 %v472, %v473
        %v475 = vsel %vm435, %v431, 0.0
        %v476 = vadd.f32 %v474, %v475
        %v477 = vsel %vm435, %v432, 0.0
        %v478 = vadd.f32 %v476, %v477
        %v479 = vsel %vm435, %v433, 0.0
        %v480 = vadd.f32 %v478, %v479
        %v481 = vsel %vm435, %v434, 0.0
        %v482 = vadd.f32 %v480, %v481
        %v483 = vrot.slane %v482, 4
        %v484 = vadd.f32 %v482, %v483
        %v485 = vrot.slane %v484, 2
        %v486 = vadd.f32 %v484, %v485
        %v487 = vrot.slane %v486, 1
        %v488 = vadd.f32 %v486, %v487
        %v489 = vmul.f32 %v488, 0.1
        %v490 = vmax.f32 %v488, %v489
        %v491 = vld [vmem:[%s3] sm:$0xff]
        %v492 = vld [vmem:[%s3 + $0x8] sm:$0xff]
        %v493 = vld [vmem:[%s3 + $0x10] sm:$0xff]
        %v494 = vld [vmem:[%s3 + $0x18] sm:$0xff]
        %v495 = vld [vmem:[%s3 + $0x20] sm:$0xff]
        %v496 = vld [vmem:[%s3 + $0x28] sm:$0xff]
        %v497 = vld [vmem:[%s3 + $0x30] sm:$0xff]
        %v498 = vld [vmem:[%s3 + $0x38] sm:$0xff]
        %v499 = vld [vmem:[%s3 + $0x40] sm:$0xff]
        %v500 = vld [vmem:[%s3 + $0x48] sm:$0xff]
        %v501 = vld [vmem:[%s3 + $0x50] sm:$0xff]
        %v502 = vld [vmem:[%s3 + $0x58] sm:$0xff]
        %v503 = vld [vmem:[%s3 + $0x60] sm:$0xff]
        %v504 = vld [vmem:[%s3 + $0x68] sm:$0xff]
        %v505 = vld [vmem:[%s3 + $0x70] sm:$0xff]
        %v506 = vld [vmem:[%s3 + $0x78] sm:$0xff]
        %v507 = vld [vmem:[%s3 + $0x80] sm:$0xff]
        %v508 = vld [vmem:[%s3 + $0x88] sm:$0xff]
        %v509 = vld [vmem:[%s3 + $0x90] sm:$0xff]
        %v510 = vld [vmem:[%s3 + $0x98] sm:$0xff]
        %v511 = vld [vmem:[%s3 + $0xa0] sm:$0xff]
        %v512 = vld [vmem:[%s3 + $0xa8] sm:$0xff]
        %v513 = vld [vmem:[%s3 + $0xb0] sm:$0xff]
        %v514 = vld [vmem:[%s3 + $0xb8] sm:$0xff]
        %v515 = vmul.f32 %v491, %v490
        %v516 = vmul.f32 %v492, %v490
        %v517 = vmul.f32 %v493, %v490
        %v518 = vmul.f32 %v494, %v490
        %v519 = vmul.f32 %v495, %v490
        %v520 = vmul.f32 %v496, %v490
        %v521 = vmul.f32 %v497, %v490
        %v522 = vmul.f32 %v498, %v490
        %v523 = vmul.f32 %v499, %v490
        %v524 = vmul.f32 %v500, %v490
        %v525 = vmul.f32 %v501, %v490
        %v526 = vmul.f32 %v502, %v490
        %v527 = vmul.f32 %v503, %v490
        %v528 = vmul.f32 %v504, %v490
        %v529 = vmul.f32 %v505, %v490
        %v530 = vmul.f32 %v506, %v490
        %v531 = vmul.f32 %v507, %v490
        %v532 = vmul.f32 %v508, %v490
        %v533 = vmul.f32 %v509, %v490
        %v534 = vmul.f32 %v510, %v490
        %v535 = vmul.f32 %v511, %v490
        %v536 = vmul.f32 %v512, %v490
        %v537 = vmul.f32 %v513, %v490
        %v538 = vmul.f32 %v514, %v490
        %v539 = vsel %vm435, %v515, 0.0
        %540 = vadd.xlane.f32.xlu0 %v539
        %v541 = vpop.xlane.xlu0 %540
        %v542 = vsel %vm435, %v516, 0.0
        %543 = vadd.xlane.f32.xlu0 %v542
        %v544 = vpop.xlane.xlu0 %543
        %v545 = vsel %vm435, %v517, 0.0
        %546 = vadd.xlane.f32.xlu0 %v545
        %v547 = vpop.xlane.xlu0 %546
        %v548 = vsel %vm435, %v518, 0.0
        %549 = vadd.xlane.f32.xlu0 %v548
        %v550 = vpop.xlane.xlu0 %549
        %v551 = vsel %vm435, %v519, 0.0
        %552 = vadd.xlane.f32.xlu0 %v551
        %v553 = vpop.xlane.xlu0 %552
        %v554 = vsel %vm435, %v520, 0.0
        %555 = vadd.xlane.f32.xlu0 %v554
        %v556 = vpop.xlane.xlu0 %555
        %v557 = vsel %vm435, %v521, 0.0
        %558 = vadd.xlane.f32.xlu0 %v557
        %v559 = vpop.xlane.xlu0 %558
        %v560 = vsel %vm435, %v522, 0.0
        %561 = vadd.xlane.f32.xlu0 %v560
        %v562 = vpop.xlane.xlu0 %561
        %v563 = vsel %vm435, %v523, 0.0
        %564 = vadd.xlane.f32.xlu0 %v563
        %v565 = vpop.xlane.xlu0 %564
        %v566 = vsel %vm435, %v524, 0.0
        %567 = vadd.xlane.f32.xlu0 %v566
        %v568 = vpop.xlane.xlu0 %567
        %v569 = vsel %vm435, %v525, 0.0
        %570 = vadd.xlane.f32.xlu0 %v569
        %v571 = vpop.xlane.xlu0 %570
        %v572 = vsel %vm435, %v526, 0.0
        %573 = vadd.xlane.f32.xlu0 %v572
        %v574 = vpop.xlane.xlu0 %573
        %v575 = vsel %vm435, %v527, 0.0
        %576 = vadd.xlane.f32.xlu0 %v575
        %v577 = vpop.xlane.xlu0 %576
        %v578 = vsel %vm435, %v528, 0.0
        %579 = vadd.xlane.f32.xlu0 %v578
        %v580 = vpop.xlane.xlu0 %579
        %v581 = vsel %vm435, %v529, 0.0
        %582 = vadd.xlane.f32.xlu0 %v581
        %v583 = vpop.xlane.xlu0 %582
        %v584 = vsel %vm435, %v530, 0.0
        %585 = vadd.xlane.f32.xlu0 %v584
        %v586 = vpop.xlane.xlu0 %585
        %v587 = vsel %vm435, %v531, 0.0
        %588 = vadd.xlane.f32.xlu0 %v587
        %v589 = vpop.xlane.xlu0 %588
        %v590 = vsel %vm435, %v532, 0.0
        %591 = vadd.xlane.f32.xlu0 %v590
        %v592 = vpop.xlane.xlu0 %591
        %v593 = vsel %vm435, %v533, 0.0
        %594 = vadd.xlane.f32.xlu0 %v593
        %v595 = vpop.xlane.xlu0 %594
        %v596 = vsel %vm435, %v534, 0.0
        %597 = vadd.xlane.f32.xlu0 %v596
        %v598 = vpop.xlane.xlu0 %597
        %v599 = vsel %vm435, %v535, 0.0
        %600 = vadd.xlane.f32.xlu0 %v599
        %v601 = vpop.xlane.xlu0 %600
        %v602 = vsel %vm435, %v536, 0.0
        %603 = vadd.xlane.f32.xlu0 %v602
        %v604 = vpop.xlane.xlu0 %603
        %v605 = vsel %vm435, %v537, 0.0
        %606 = vadd.xlane.f32.xlu0 %v605
        %v607 = vpop.xlane.xlu0 %606
        %v608 = vsel %vm435, %v538, 0.0
        %609 = vadd.xlane.f32.xlu0 %v608
        %v610 = vpop.xlane.xlu0 %609
        %v611 = vld [vmem:[%s1] sm:$0xff]
        %v612 = vld [vmem:[%s1 + $0x8] sm:$0xff]
        %v613 = vld [vmem:[%s1 + $0x10] sm:$0xff]
        %v614 = vld [vmem:[%s1 + $0x18] sm:$0xff]
        %v615 = vld [vmem:[%s1 + $0x20] sm:$0xff]
        %v616 = vld [vmem:[%s1 + $0x28] sm:$0xff]
        %v617 = vld [vmem:[%s1 + $0x30] sm:$0xff]
        %v618 = vld [vmem:[%s1 + $0x38] sm:$0xff]
        %v619 = vld [vmem:[%s1 + $0x40] sm:$0xff]
        %v620 = vld [vmem:[%s1 + $0x48] sm:$0xff]
        %v621 = vld [vmem:[%s1 + $0x50] sm:$0xff]
        %v622 = vld [vmem:[%s1 + $0x58] sm:$0xff]
        %v623 = vld [vmem:[%s1 + $0x60] sm:$0xff]
        %v624 = vld [vmem:[%s1 + $0x68] sm:$0xff]
        %v625 = vld [vmem:[%s1 + $0x70] sm:$0xff]
        %v626 = vld [vmem:[%s1 + $0x78] sm:$0xff]
        %v627 = vld [vmem:[%s1 + $0x80] sm:$0xff]
        %v628 = vld [vmem:[%s1 + $0x88] sm:$0xff]
        %v629 = vld [vmem:[%s1 + $0x90] sm:$0xff]
        %v630 = vld [vmem:[%s1 + $0x98] sm:$0xff]
        %v631 = vld [vmem:[%s1 + $0xa0] sm:$0xff]
        %v632 = vld [vmem:[%s1 + $0xa8] sm:$0xff]
        %v633 = vld [vmem:[%s1 + $0xb0] sm:$0xff]
        %v634 = vld [vmem:[%s1 + $0xb8] sm:$0xff]
        %v635 = vld [vmem:[%s1 + $0xc0] sm:$0xff]
        %v636 = vld [vmem:[%s1 + $0xc8] sm:$0xff]
        %v637 = vld [vmem:[%s1 + $0xd0] sm:$0xff]
        %v638 = vld [vmem:[%s1 + $0xd8] sm:$0xff]
        %v639 = vld [vmem:[%s1 + $0xe0] sm:$0xff]
        %v640 = vld [vmem:[%s1 + $0xe8] sm:$0xff]
        %v641 = vld [vmem:[%s1 + $0xf0] sm:$0xff]
        %v642 = vld [vmem:[%s1 + $0xf8] sm:$0xff]
        %v643 = vld [vmem:[%s1 + $0x100] sm:$0xff]
        %v644 = vld [vmem:[%s1 + $0x108] sm:$0xff]
        %v645 = vld [vmem:[%s1 + $0x110] sm:$0xff]
        %v646 = vld [vmem:[%s1 + $0x118] sm:$0xff]
        %v647 = vld [vmem:[%s1 + $0x120] sm:$0xff]
        %v648 = vld [vmem:[%s1 + $0x128] sm:$0xff]
        %v649 = vld [vmem:[%s1 + $0x130] sm:$0xff]
        %v650 = vld [vmem:[%s1 + $0x138] sm:$0xff]
        %v651 = vld [vmem:[%s1 + $0x140] sm:$0xff]
        %v652 = vld [vmem:[%s1 + $0x148] sm:$0xff]
        %v653 = vld [vmem:[%s1 + $0x150] sm:$0xff]
        %v654 = vld [vmem:[%s1 + $0x158] sm:$0xff]
        %v655 = vld [vmem:[%s1 + $0x160] sm:$0xff]
        %v656 = vld [vmem:[%s1 + $0x168] sm:$0xff]
        %v657 = vld [vmem:[%s1 + $0x170] sm:$0xff]
        %v658 = vld [vmem:[%s1 + $0x178] sm:$0xff]
        %vm659 = vcmask 523264
        %v661 = vsel %vm659, %v612, 0
        %v664 = vsel %vm659, %v614, 0
        %v667 = vsel %vm659, %v616, 0
        %v670 = vsel %vm659, %v618, 0
        %v673 = vsel %vm659, %v620, 0
        %v676 = vsel %vm659, %v622, 0
        %v679 = vsel %vm659, %v624, 0
        %v682 = vsel %vm659, %v626, 0
        %v685 = vsel %vm659, %v628, 0
        %v688 = vsel %vm659, %v630, 0
        %v691 = vsel %vm659, %v632, 0
        %v694 = vsel %vm659, %v634, 0
        %v697 = vsel %vm659, %v636, 0
        %v700 = vsel %vm659, %v638, 0
        %v703 = vsel %vm659, %v640, 0
        %v706 = vsel %vm659, %v642, 0
        %v709 = vsel %vm659, %v644, 0
        %v712 = vsel %vm659, %v646, 0
        %v715 = vsel %vm659, %v648, 0
        %v718 = vsel %vm659, %v650, 0
        %v721 = vsel %vm659, %v652, 0
        %v724 = vsel %vm659, %v654, 0
        %v727 = vsel %vm659, %v656, 0
        %v730 = vsel %vm659, %v658, 0
        %732 = vmatprep.subr.mxu0 %v274
        %733 = vmatpush1.msra.mxu0 %v273
        %734 = vmatprep.subr.mxu0 %v272
        %735 = vmatpush1.msra.mxu0 %v271
        %736 = vmatprep.subr.mxu0 %v270
        %737 = vmatpush1.msra.mxu0 %v269
        %738 = vmatprep.subr.mxu0 %v268
        %739 = vmatpush1.msra.mxu0 %v267
        %740 = vmatprep.subr.mxu0 %v266
        %741 = vmatpush1.msra.mxu0 %v265
        %742 = vmatprep.subr.mxu0 %v264
        %743 = vmatpush1.msra.mxu0 %v263
        %744 = vmatprep.subr.mxu0 %v262
        %745 = vmatpush1.msra.mxu0 %v261
        %746 = vmatprep.subr.mxu0 %v260
        %747 = vmatpush1.msra.mxu0 %v259
        %748 = vmatprep.subr.mxu0 %v258
        %749 = vmatpush1.msra.mxu0 %v257
        %750 = vmatprep.subr.mxu0 %v256
        %751 = vmatpush1.msra.mxu0 %v255
        %752 = vmatprep.subr.mxu0 %v254
        %753 = vmatpush1.msra.mxu0 %v253
        %754 = vmatprep.subr.mxu0 %v252
        %755 = vmatpush1.msra.mxu0 %v251
        %756 = vmatprep.subr.mxu0 %v250
        %757 = vmatpush1.msra.mxu0 %v249
        %758 = vmatprep.subr.mxu0 %v248
        %759 = vmatpush1.msra.mxu0 %v247
        %760 = vmatprep.subr.mxu0 %v246
        %761 = vmatpush1.msra.mxu0 %v245
        %762 = vmatprep.subr.mxu0 %v244
        %763 = vmatpush1.msra.mxu0 %v243
        %764 = vmatprep.subr.mxu0 0.0
        %765 = vmatpush2.msra.mxu0 0.0
        %766 = vmatprep.subr.mxu0 0.0
        %767 = vmatpush2.msra.mxu0 0.0
        %768 = vmatprep.subr.mxu0 0.0
        %769 = vmatpush2.msra.mxu0 0.0
        %770 = vmatprep.subr.mxu0 0.0
        %771 = vmatpush2.msra.mxu0 0.0
        %772 = vmatprep.subr.mxu0 0.0
        %773 = vmatpush2.msra.mxu0 0.0
        %774 = vmatprep.subr.mxu0 0.0
        %775 = vmatpush2.msra.mxu0 0.0
        %776 = vmatprep.subr.mxu0 0.0
        %777 = vmatpush2.msra.mxu0 0.0
        %778 = vmatprep.subr.mxu0 0.0
        %779 = vmatpush2.msra.mxu0 0.0
        %780 = vmatprep.subr.mxu0 %v290
        %781 = vmatpush2.msra.mxu0 %v289
        %782 = vmatprep.subr.mxu0 %v288
        %783 = vmatpush2.msra.mxu0 %v287
        %784 = vmatprep.subr.mxu0 %v286
        %785 = vmatpush2.msra.mxu0 %v285
        %786 = vmatprep.subr.mxu0 %v284
        %787 = vmatpush2.msra.mxu0 %v283
        %788 = vmatprep.subr.mxu0 %v282
        %789 = vmatpush2.msra.mxu0 %v281
        %790 = vmatprep.subr.mxu0 %v280
        %791 = vmatpush2.msra.mxu0 %v279
        %792 = vmatprep.subr.mxu0 %v278
        %793 = vmatpush2.msra.mxu0 %v277
        %794 = vmatprep.subr.mxu0 %v276
        %795 = vmatpush2.msra.mxu0 %v275
        %796 = vmatprep.mubr.f32.mxu0 %v661
        %797 = vmatmul.mubr.f32.gmra.mxu0 %v611
        %v798 = vpop.f32.mrf.mxu0
        %v799 = vadd.f32 0.0, %v798
        %v800 = vpop.f32.mrf.mxu0
        %v801 = vadd.f32 0.0, %v800
        %802 = vmatprep.mubr.f32.mxu0 %v664
        %803 = vmatmul.mubr.f32.gmra.mxu0 %v613
        %v804 = vpop.f32.mrf.mxu0
        %v805 = vadd.f32 0.0, %v804
        %v806 = vpop.f32.mrf.mxu0
        %v807 = vadd.f32 0.0, %v806
        %808 = vmatprep.mubr.f32.mxu0 %v667
        %809 = vmatmul.mubr.f32.gmra.mxu0 %v615
        %v810 = vpop.f32.mrf.mxu0
        %v811 = vadd.f32 0.0, %v810
        %v812 = vpop.f32.mrf.mxu0
        %v813 = vadd.f32 0.0, %v812
        %814 = vmatprep.mubr.f32.mxu0 %v670
        %815 = vmatmul.mubr.f32.gmra.mxu0 %v617
        %v816 = vpop.f32.mrf.mxu0
        %v817 = vadd.f32 0.0, %v816
        %v818 = vpop.f32.mrf.mxu0
        %v819 = vadd.f32 0.0, %v818
        %820 = vmatprep.mubr.f32.mxu0 %v673
        %821 = vmatmul.mubr.f32.gmra.mxu0 %v619
        %v822 = vpop.f32.mrf.mxu0
        %v823 = vadd.f32 0.0, %v822
        %v824 = vpop.f32.mrf.mxu0
        %v825 = vadd.f32 0.0, %v824
        %826 = vmatprep.mubr.f32.mxu0 %v676
        %827 = vmatmul.mubr.f32.gmra.mxu0 %v621
        %v828 = vpop.f32.mrf.mxu0
        %v829 = vadd.f32 0.0, %v828
        %v830 = vpop.f32.mrf.mxu0
        %v831 = vadd.f32 0.0, %v830
        %832 = vmatprep.mubr.f32.mxu0 %v679
        %833 = vmatmul.mubr.f32.gmra.mxu0 %v623
        %v834 = vpop.f32.mrf.mxu0
        %v835 = vadd.f32 0.0, %v834
        %v836 = vpop.f32.mrf.mxu0
        %v837 = vadd.f32 0.0, %v836
        %838 = vmatprep.mubr.f32.mxu0 %v682
        %839 = vmatmul.mubr.f32.gmra.mxu0 %v625
        %v840 = vpop.f32.mrf.mxu0
        %v841 = vadd.f32 0.0, %v840
        %v842 = vpop.f32.mrf.mxu0
        %v843 = vadd.f32 0.0, %v842
        %844 = vmatprep.mubr.f32.mxu0 %v685
        %845 = vmatmul.mubr.f32.gmra.mxu0 %v627
        %v846 = vpop.f32.mrf.mxu0
        %v847 = vadd.f32 0.0, %v846
        %v848 = vpop.f32.mrf.mxu0
        %v849 = vadd.f32 0.0, %v848
        %850 = vmatprep.mubr.f32.mxu0 %v688
        %851 = vmatmul.mubr.f32.gmra.mxu0 %v629
        %v852 = vpop.f32.mrf.mxu0
        %v853 = vadd.f32 0.0, %v852
        %v854 = vpop.f32.mrf.mxu0
        %v855 = vadd.f32 0.0, %v854
        %856 = vmatprep.mubr.f32.mxu0 %v691
        %857 = vmatmul.mubr.f32.gmra.mxu0 %v631
        %v858 = vpop.f32.mrf.mxu0
        %v859 = vadd.f32 0.0, %v858
        %v860 = vpop.f32.mrf.mxu0
        %v861 = vadd.f32 0.0, %v860
        %862 = vmatprep.mubr.f32.mxu0 %v694
        %863 = vmatmul.mubr.f32.gmra.mxu0 %v633
        %v864 = vpop.f32.mrf.mxu0
        %v865 = vadd.f32 0.0, %v864
        %v866 = vpop.f32.mrf.mxu0
        %v867 = vadd.f32 0.0, %v866
        %868 = vmatprep.mubr.f32.mxu0 %v697
        %869 = vmatmul.mubr.f32.gmra.mxu0 %v635
        %v870 = vpop.f32.mrf.mxu0
        %v871 = vadd.f32 0.0, %v870
        %v872 = vpop.f32.mrf.mxu0
        %v873 = vadd.f32 0.0, %v872
        %874 = vmatprep.mubr.f32.mxu0 %v700
        %875 = vmatmul.mubr.f32.gmra.mxu0 %v637
        %v876 = vpop.f32.mrf.mxu0
        %v877 = vadd.f32 0.0, %v876
        %v878 = vpop.f32.mrf.mxu0
        %v879 = vadd.f32 0.0, %v878
        %880 = vmatprep.mubr.f32.mxu0 %v703
        %881 = vmatmul.mubr.f32.gmra.mxu0 %v639
        %v882 = vpop.f32.mrf.mxu0
        %v883 = vadd.f32 0.0, %v882
        %v884 = vpop.f32.mrf.mxu0
        %v885 = vadd.f32 0.0, %v884
        %886 = vmatprep.mubr.f32.mxu0 %v706
        %887 = vmatmul.mubr.f32.gmra.mxu0 %v641
        %v888 = vpop.f32.mrf.mxu0
        %v889 = vadd.f32 0.0, %v888
        %v890 = vpop.f32.mrf.mxu0
        %v891 = vadd.f32 0.0, %v890
        %892 = vmatprep.mubr.f32.mxu0 %v709
        %893 = vmatmul.mubr.f32.gmra.mxu0 %v643
        %v894 = vpop.f32.mrf.mxu0
        %v895 = vadd.f32 0.0, %v894
        %v896 = vpop.f32.mrf.mxu0
        %v897 = vadd.f32 0.0, %v896
        %898 = vmatprep.mubr.f32.mxu0 %v712
        %899 = vmatmul.mubr.f32.gmra.mxu0 %v645
        %v900 = vpop.f32.mrf.mxu0
        %v901 = vadd.f32 0.0, %v900
        %v902 = vpop.f32.mrf.mxu0
        %v903 = vadd.f32 0.0, %v902
        %904 = vmatprep.mubr.f32.mxu0 %v715
        %905 = vmatmul.mubr.f32.gmra.mxu0 %v647
        %v906 = vpop.f32.mrf.mxu0
        %v907 = vadd.f32 0.0, %v906
        %v908 = vpop.f32.mrf.mxu0
        %v909 = vadd.f32 0.0, %v908
        %910 = vmatprep.mubr.f32.mxu0 %v718
        %911 = vmatmul.mubr.f32.gmra.mxu0 %v649
        %v912 = vpop.f32.mrf.mxu0
        %v913 = vadd.f32 0.0, %v912
        %v914 = vpop.f32.mrf.mxu0
        %v915 = vadd.f32 0.0, %v914
        %916 = vmatprep.mubr.f32.mxu0 %v721
        %917 = vmatmul.mubr.f32.gmra.mxu0 %v651
        %v918 = vpop.f32.mrf.mxu0
        %v919 = vadd.f32 0.0, %v918
        %v920 = vpop.f32.mrf.mxu0
        %v921 = vadd.f32 0.0, %v920
        %922 = vmatprep.mubr.f32.mxu0 %v724
        %923 = vmatmul.mubr.f32.gmra.mxu0 %v653
        %v924 = vpop.f32.mrf.mxu0
        %v925 = vadd.f32 0.0, %v924
        %v926 = vpop.f32.mrf.mxu0
        %v927 = vadd.f32 0.0, %v926
        %928 = vmatprep.mubr.f32.mxu0 %v727
        %929 = vmatmul.mubr.f32.gmra.mxu0 %v655
        %v930 = vpop.f32.mrf.mxu0
        %v931 = vadd.f32 0.0, %v930
        %v932 = vpop.f32.mrf.mxu0
        %v933 = vadd.f32 0.0, %v932
        %934 = vmatprep.mubr.f32.mxu0 %v730
        %935 = vmatmul.mubr.f32.gmra.mxu0 %v657
        %v936 = vpop.f32.mrf.mxu0
        %v937 = vadd.f32 0.0, %v936
        %v938 = vpop.f32.mrf.mxu0
        %v939 = vadd.f32 0.0, %v938
        %940 = vdwg.mxu0
        %v941 = vmul.f32 %v799, 0.1
        %v942 = vmul.f32 %v801, 0.1
        %v943 = vmul.f32 %v805, 0.1
        %v944 = vmul.f32 %v807, 0.1
        %v945 = vmul.f32 %v811, 0.1
        %v946 = vmul.f32 %v813, 0.1
        %v947 = vmul.f32 %v817, 0.1
        %v948 = vmul.f32 %v819, 0.1
        %v949 = vmul.f32 %v823, 0.1
        %v950 = vmul.f32 %v825, 0.1
        %v951 = vmul.f32 %v829, 0.1
        %v952 = vmul.f32 %v831, 0.1
        %v953 = vmul.f32 %v835, 0.1
        %v954 = vmul.f32 %v837, 0.1
        %v955 = vmul.f32 %v841, 0.1
        %v956 = vmul.f32 %v843, 0.1
        %v957 = vmul.f32 %v847, 0.1
        %v958 = vmul.f32 %v849, 0.1
        %v959 = vmul.f32 %v853, 0.1
        %v960 = vmul.f32 %v855, 0.1
        %v961 = vmul.f32 %v859, 0.1
        %v962 = vmul.f32 %v861, 0.1
        %v963 = vmul.f32 %v865, 0.1
        %v964 = vmul.f32 %v867, 0.1
        %v965 = vmul.f32 %v871, 0.1
        %v966 = vmul.f32 %v873, 0.1
        %v967 = vmul.f32 %v877, 0.1
        %v968 = vmul.f32 %v879, 0.1
        %v969 = vmul.f32 %v883, 0.1
        %v970 = vmul.f32 %v885, 0.1
        %v971 = vmul.f32 %v889, 0.1
        %v972 = vmul.f32 %v891, 0.1
        %v973 = vmul.f32 %v895, 0.1
        %v974 = vmul.f32 %v897, 0.1
        %v975 = vmul.f32 %v901, 0.1
        %v976 = vmul.f32 %v903, 0.1
        %v977 = vmul.f32 %v907, 0.1
        %v978 = vmul.f32 %v909, 0.1
        %v979 = vmul.f32 %v913, 0.1
        %v980 = vmul.f32 %v915, 0.1
        %v981 = vmul.f32 %v919, 0.1
        %v982 = vmul.f32 %v921, 0.1
        %v983 = vmul.f32 %v925, 0.1
        %v984 = vmul.f32 %v927, 0.1
        %v985 = vmul.f32 %v931, 0.1
        %v986 = vmul.f32 %v933, 0.1
        %v987 = vmul.f32 %v937, 0.1
        %v988 = vmul.f32 %v939, 0.1
        %v989 = vmax.f32 %v799, %v941
        %v990 = vmax.f32 %v801, %v942
        %v991 = vmax.f32 %v805, %v943
        %v992 = vmax.f32 %v807, %v944
        %v993 = vmax.f32 %v811, %v945
        %v994 = vmax.f32 %v813, %v946
        %v995 = vmax.f32 %v817, %v947
        %v996 = vmax.f32 %v819, %v948
        %v997 = vmax.f32 %v823, %v949
        %v998 = vmax.f32 %v825, %v950
        %v999 = vmax.f32 %v829, %v951
        %v1000 = vmax.f32 %v831, %v952
        %v1001 = vmax.f32 %v835, %v953
        %v1002 = vmax.f32 %v837, %v954
        %v1003 = vmax.f32 %v841, %v955
        %v1004 = vmax.f32 %v843, %v956
        %v1005 = vmax.f32 %v847, %v957
        %v1006 = vmax.f32 %v849, %v958
        %v1007 = vmax.f32 %v853, %v959
        %v1008 = vmax.f32 %v855, %v960
        %v1009 = vmax.f32 %v859, %v961
        %v1010 = vmax.f32 %v861, %v962
        %v1011 = vmax.f32 %v865, %v963
        %v1012 = vmax.f32 %v867, %v964
        %v1013 = vmax.f32 %v871, %v965
        %v1014 = vmax.f32 %v873, %v966
        %v1015 = vmax.f32 %v877, %v967
        %v1016 = vmax.f32 %v879, %v968
        %v1017 = vmax.f32 %v883, %v969
        %v1018 = vmax.f32 %v885, %v970
        %v1019 = vmax.f32 %v889, %v971
        %v1020 = vmax.f32 %v891, %v972
        %v1021 = vmax.f32 %v895, %v973
        %v1022 = vmax.f32 %v897, %v974
        %v1023 = vmax.f32 %v901, %v975
        %v1024 = vmax.f32 %v903, %v976
        %v1025 = vmax.f32 %v907, %v977
        %v1026 = vmax.f32 %v909, %v978
        %v1027 = vmax.f32 %v913, %v979
        %v1028 = vmax.f32 %v915, %v980
        %v1029 = vmax.f32 %v919, %v981
        %v1030 = vmax.f32 %v921, %v982
        %v1031 = vmax.f32 %v925, %v983
        %v1032 = vmax.f32 %v927, %v984
        %v1033 = vmax.f32 %v931, %v985
        %v1034 = vmax.f32 %v933, %v986
        %v1035 = vmax.f32 %v937, %v987
        %v1036 = vmax.f32 %v939, %v988
        %v1037 = vld [vmem:[%s4] sm:$0xff]
        %v1038 = vld [vmem:[%s4 + $0x8] sm:$0xff]
        %v1039 = vld [vmem:[%s4 + $0x10] sm:$0xff]
        %v1040 = vld [vmem:[%s4 + $0x18] sm:$0xff]
        %v1041 = vld [vmem:[%s4 + $0x20] sm:$0xff]
        %v1042 = vld [vmem:[%s4 + $0x28] sm:$0xff]
        %v1043 = vld [vmem:[%s4 + $0x30] sm:$0xff]
        %v1044 = vld [vmem:[%s4 + $0x38] sm:$0xff]
        %v1045 = vld [vmem:[%s4 + $0x40] sm:$0xff]
        %v1046 = vld [vmem:[%s4 + $0x48] sm:$0xff]
        %v1047 = vld [vmem:[%s4 + $0x50] sm:$0xff]
        %v1048 = vld [vmem:[%s4 + $0x58] sm:$0xff]
        %v1049 = vld [vmem:[%s4 + $0x60] sm:$0xff]
        %v1050 = vld [vmem:[%s4 + $0x68] sm:$0xff]
        %v1051 = vld [vmem:[%s4 + $0x70] sm:$0xff]
        %v1052 = vld [vmem:[%s4 + $0x78] sm:$0xff]
        %v1053 = vld [vmem:[%s4 + $0x80] sm:$0xff]
        %v1054 = vld [vmem:[%s4 + $0x88] sm:$0xff]
        %v1055 = vld [vmem:[%s4 + $0x90] sm:$0xff]
        %v1056 = vld [vmem:[%s4 + $0x98] sm:$0xff]
        %v1057 = vld [vmem:[%s4 + $0xa0] sm:$0xff]
        %v1058 = vld [vmem:[%s4 + $0xa8] sm:$0xff]
        %v1059 = vld [vmem:[%s4 + $0xb0] sm:$0xff]
        %v1060 = vld [vmem:[%s4 + $0xb8] sm:$0xff]
        %1062 = vset.pattern.permute.xlu0 0
        %1063 = vperm.xlu0 %1062, %v1037
        %v1064 = vpop.permute.xlu0 %1063
        %1067 = vset.pattern.permute.xlu0 0
        %1068 = vperm.xlu0 %1067, %v1038
        %v1069 = vpop.permute.xlu0 %1068
        %1072 = vset.pattern.permute.xlu0 0
        %1073 = vperm.xlu0 %1072, %v1039
        %v1074 = vpop.permute.xlu0 %1073
        %1077 = vset.pattern.permute.xlu0 0
        %1078 = vperm.xlu0 %1077, %v1040
        %v1079 = vpop.permute.xlu0 %1078
        %1082 = vset.pattern.permute.xlu0 0
        %1083 = vperm.xlu0 %1082, %v1041
        %v1084 = vpop.permute.xlu0 %1083
        %1087 = vset.pattern.permute.xlu0 0
        %1088 = vperm.xlu0 %1087, %v1042
        %v1089 = vpop.permute.xlu0 %1088
        %1092 = vset.pattern.permute.xlu0 0
        %1093 = vperm.xlu0 %1092, %v1043
        %v1094 = vpop.permute.xlu0 %1093
        %1097 = vset.pattern.permute.xlu0 0
        %1098 = vperm.xlu0 %1097, %v1044
        %v1099 = vpop.permute.xlu0 %1098
        %1102 = vset.pattern.permute.xlu0 0
        %1103 = vperm.xlu0 %1102, %v1045
        %v1104 = vpop.permute.xlu0 %1103
        %1107 = vset.pattern.permute.xlu0 0
        %1108 = vperm.xlu0 %1107, %v1046
        %v1109 = vpop.permute.xlu0 %1108
        %1112 = vset.pattern.permute.xlu0 0
        %1113 = vperm.xlu0 %1112, %v1047
        %v1114 = vpop.permute.xlu0 %1113
        %1117 = vset.pattern.permute.xlu0 0
        %1118 = vperm.xlu0 %1117, %v1048
        %v1119 = vpop.permute.xlu0 %1118
        %1122 = vset.pattern.permute.xlu0 0
        %1123 = vperm.xlu0 %1122, %v1049
        %v1124 = vpop.permute.xlu0 %1123
        %1127 = vset.pattern.permute.xlu0 0
        %1128 = vperm.xlu0 %1127, %v1050
        %v1129 = vpop.permute.xlu0 %1128
        %1132 = vset.pattern.permute.xlu0 0
        %1133 = vperm.xlu0 %1132, %v1051
        %v1134 = vpop.permute.xlu0 %1133
        %1137 = vset.pattern.permute.xlu0 0
        %1138 = vperm.xlu0 %1137, %v1052
        %v1139 = vpop.permute.xlu0 %1138
        %1142 = vset.pattern.permute.xlu0 0
        %1143 = vperm.xlu0 %1142, %v1053
        %v1144 = vpop.permute.xlu0 %1143
        %1147 = vset.pattern.permute.xlu0 0
        %1148 = vperm.xlu0 %1147, %v1054
        %v1149 = vpop.permute.xlu0 %1148
        %1152 = vset.pattern.permute.xlu0 0
        %1153 = vperm.xlu0 %1152, %v1055
        %v1154 = vpop.permute.xlu0 %1153
        %1157 = vset.pattern.permute.xlu0 0
        %1158 = vperm.xlu0 %1157, %v1056
        %v1159 = vpop.permute.xlu0 %1158
        %1162 = vset.pattern.permute.xlu0 0
        %1163 = vperm.xlu0 %1162, %v1057
        %v1164 = vpop.permute.xlu0 %1163
        %1167 = vset.pattern.permute.xlu0 0
        %1168 = vperm.xlu0 %1167, %v1058
        %v1169 = vpop.permute.xlu0 %1168
        %1172 = vset.pattern.permute.xlu0 0
        %1173 = vperm.xlu0 %1172, %v1059
        %v1174 = vpop.permute.xlu0 %1173
        %1177 = vset.pattern.permute.xlu0 0
        %1178 = vperm.xlu0 %1177, %v1060
        %v1179 = vpop.permute.xlu0 %1178
        %v1181 = vmul.f32 %v989, %v1064
        %v1182 = vmul.f32 %v990, %v1064
        %v1183 = vmul.f32 %v991, %v1069
        %v1184 = vmul.f32 %v992, %v1069
        %v1185 = vmul.f32 %v993, %v1074
        %v1186 = vmul.f32 %v994, %v1074
        %v1187 = vmul.f32 %v995, %v1079
        %v1188 = vmul.f32 %v996, %v1079
        %v1189 = vmul.f32 %v997, %v1084
        %v1190 = vmul.f32 %v998, %v1084
        %v1191 = vmul.f32 %v999, %v1089
        %v1192 = vmul.f32 %v1000, %v1089
        %v1193 = vmul.f32 %v1001, %v1094
        %v1194 = vmul.f32 %v1002, %v1094
        %v1195 = vmul.f32 %v1003, %v1099
        %v1196 = vmul.f32 %v1004, %v1099
        %v1197 = vmul.f32 %v1005, %v1104
        %v1198 = vmul.f32 %v1006, %v1104
        %v1199 = vmul.f32 %v1007, %v1109
        %v1200 = vmul.f32 %v1008, %v1109
        %v1201 = vmul.f32 %v1009, %v1114
        %v1202 = vmul.f32 %v1010, %v1114
        %v1203 = vmul.f32 %v1011, %v1119
        %v1204 = vmul.f32 %v1012, %v1119
        %v1205 = vmul.f32 %v1013, %v1124
        %v1206 = vmul.f32 %v1014, %v1124
        %v1207 = vmul.f32 %v1015, %v1129
        %v1208 = vmul.f32 %v1016, %v1129
        %v1209 = vmul.f32 %v1017, %v1134
        %v1210 = vmul.f32 %v1018, %v1134
        %v1211 = vmul.f32 %v1019, %v1139
        %v1212 = vmul.f32 %v1020, %v1139
        %v1213 = vmul.f32 %v1021, %v1144
        %v1214 = vmul.f32 %v1022, %v1144
        %v1215 = vmul.f32 %v1023, %v1149
        %v1216 = vmul.f32 %v1024, %v1149
        %v1217 = vmul.f32 %v1025, %v1154
        %v1218 = vmul.f32 %v1026, %v1154
        %v1219 = vmul.f32 %v1027, %v1159
        %v1220 = vmul.f32 %v1028, %v1159
        %v1221 = vmul.f32 %v1029, %v1164
        %v1222 = vmul.f32 %v1030, %v1164
        %v1223 = vmul.f32 %v1031, %v1169
        %v1224 = vmul.f32 %v1032, %v1169
        %v1225 = vmul.f32 %v1033, %v1174
        %v1226 = vmul.f32 %v1034, %v1174
        %v1227 = vmul.f32 %v1035, %v1179
        %v1228 = vmul.f32 %v1036, %v1179
        %v1229 = vadd.f32 %v1181, %v541
        %v1230 = vadd.f32 %v1182, %v541
        %v1231 = vadd.f32 %v1183, %v544
        %v1232 = vadd.f32 %v1184, %v544
        %v1233 = vadd.f32 %v1185, %v547
        %v1234 = vadd.f32 %v1186, %v547
        %v1235 = vadd.f32 %v1187, %v550
        %v1236 = vadd.f32 %v1188, %v550
        %v1237 = vadd.f32 %v1189, %v553
        %v1238 = vadd.f32 %v1190, %v553
        %v1239 = vadd.f32 %v1191, %v556
        %v1240 = vadd.f32 %v1192, %v556
        %v1241 = vadd.f32 %v1193, %v559
        %v1242 = vadd.f32 %v1194, %v559
        %v1243 = vadd.f32 %v1195, %v562
        %v1244 = vadd.f32 %v1196, %v562
        %v1245 = vadd.f32 %v1197, %v565
        %v1246 = vadd.f32 %v1198, %v565
        %v1247 = vadd.f32 %v1199, %v568
        %v1248 = vadd.f32 %v1200, %v568
        %v1249 = vadd.f32 %v1201, %v571
        %v1250 = vadd.f32 %v1202, %v571
        %v1251 = vadd.f32 %v1203, %v574
        %v1252 = vadd.f32 %v1204, %v574
        %v1253 = vadd.f32 %v1205, %v577
        %v1254 = vadd.f32 %v1206, %v577
        %v1255 = vadd.f32 %v1207, %v580
        %v1256 = vadd.f32 %v1208, %v580
        %v1257 = vadd.f32 %v1209, %v583
        %v1258 = vadd.f32 %v1210, %v583
        %v1259 = vadd.f32 %v1211, %v586
        %v1260 = vadd.f32 %v1212, %v586
        %v1261 = vadd.f32 %v1213, %v589
        %v1262 = vadd.f32 %v1214, %v589
        %v1263 = vadd.f32 %v1215, %v592
        %v1264 = vadd.f32 %v1216, %v592
        %v1265 = vadd.f32 %v1217, %v595
        %v1266 = vadd.f32 %v1218, %v595
        %v1267 = vadd.f32 %v1219, %v598
        %v1268 = vadd.f32 %v1220, %v598
        %v1269 = vadd.f32 %v1221, %v601
        %v1270 = vadd.f32 %v1222, %v601
        %v1271 = vadd.f32 %v1223, %v604
        %v1272 = vadd.f32 %v1224, %v604
        %v1273 = vadd.f32 %v1225, %v607
        %v1274 = vadd.f32 %v1226, %v607
        %v1275 = vadd.f32 %v1227, %v610
        %v1276 = vadd.f32 %v1228, %v610
        %v1277 = vxor.u32 %v1229, 2147483648
        %v1278 = vxor.u32 %v1230, 2147483648
        %v1279 = vxor.u32 %v1231, 2147483648
        %v1280 = vxor.u32 %v1232, 2147483648
        %v1281 = vxor.u32 %v1233, 2147483648
        %v1282 = vxor.u32 %v1234, 2147483648
        %v1283 = vxor.u32 %v1235, 2147483648
        %v1284 = vxor.u32 %v1236, 2147483648
        %v1285 = vxor.u32 %v1237, 2147483648
        %v1286 = vxor.u32 %v1238, 2147483648
        %v1287 = vxor.u32 %v1239, 2147483648
        %v1288 = vxor.u32 %v1240, 2147483648
        %v1289 = vxor.u32 %v1241, 2147483648
        %v1290 = vxor.u32 %v1242, 2147483648
        %v1291 = vxor.u32 %v1243, 2147483648
        %v1292 = vxor.u32 %v1244, 2147483648
        %v1293 = vxor.u32 %v1245, 2147483648
        %v1294 = vxor.u32 %v1246, 2147483648
        %v1295 = vxor.u32 %v1247, 2147483648
        %v1296 = vxor.u32 %v1248, 2147483648
        %v1297 = vxor.u32 %v1249, 2147483648
        %v1298 = vxor.u32 %v1250, 2147483648
        %v1299 = vxor.u32 %v1251, 2147483648
        %v1300 = vxor.u32 %v1252, 2147483648
        %v1301 = vxor.u32 %v1253, 2147483648
        %v1302 = vxor.u32 %v1254, 2147483648
        %v1303 = vxor.u32 %v1255, 2147483648
        %v1304 = vxor.u32 %v1256, 2147483648
        %v1305 = vxor.u32 %v1257, 2147483648
        %v1306 = vxor.u32 %v1258, 2147483648
        %v1307 = vxor.u32 %v1259, 2147483648
        %v1308 = vxor.u32 %v1260, 2147483648
        %v1309 = vxor.u32 %v1261, 2147483648
        %v1310 = vxor.u32 %v1262, 2147483648
        %v1311 = vxor.u32 %v1263, 2147483648
        %v1312 = vxor.u32 %v1264, 2147483648
        %v1313 = vxor.u32 %v1265, 2147483648
        %v1314 = vxor.u32 %v1266, 2147483648
        %v1315 = vxor.u32 %v1267, 2147483648
        %v1316 = vxor.u32 %v1268, 2147483648
        %v1317 = vxor.u32 %v1269, 2147483648
        %v1318 = vxor.u32 %v1270, 2147483648
        %v1319 = vxor.u32 %v1271, 2147483648
        %v1320 = vxor.u32 %v1272, 2147483648
        %v1321 = vxor.u32 %v1273, 2147483648
        %v1322 = vxor.u32 %v1274, 2147483648
        %v1323 = vxor.u32 %v1275, 2147483648
        %v1324 = vxor.u32 %v1276, 2147483648
        %v1325 = vmul.f32 %v1277, 1.442695
        %v1326 = vpow.pop %v1325
        %v1327 = vmul.f32 %v1278, 1.442695
        %v1328 = vpow.pop %v1327
        %v1329 = vmul.f32 %v1279, 1.442695
        %v1330 = vpow.pop %v1329
        %v1331 = vmul.f32 %v1280, 1.442695
        %v1332 = vpow.pop %v1331
        %v1333 = vmul.f32 %v1281, 1.442695
        %v1334 = vpow.pop %v1333
        %v1335 = vmul.f32 %v1282, 1.442695
        %v1336 = vpow.pop %v1335
        %v1337 = vmul.f32 %v1283, 1.442695
        %v1338 = vpow.pop %v1337
        %v1339 = vmul.f32 %v1284, 1.442695
        %v1340 = vpow.pop %v1339
        %v1341 = vmul.f32 %v1285, 1.442695
        %v1342 = vpow.pop %v1341
        %v1343 = vmul.f32 %v1286, 1.442695
        %v1344 = vpow.pop %v1343
        %v1345 = vmul.f32 %v1287, 1.442695
        %v1346 = vpow.pop %v1345
        %v1347 = vmul.f32 %v1288, 1.442695
        %v1348 = vpow.pop %v1347
        %v1349 = vmul.f32 %v1289, 1.442695
        %v1350 = vpow.pop %v1349
        %v1351 = vmul.f32 %v1290, 1.442695
        %v1352 = vpow.pop %v1351
        %v1353 = vmul.f32 %v1291, 1.442695
        %v1354 = vpow.pop %v1353
        %v1355 = vmul.f32 %v1292, 1.442695
        %v1356 = vpow.pop %v1355
        %v1357 = vmul.f32 %v1293, 1.442695
        %v1358 = vpow.pop %v1357
        %v1359 = vmul.f32 %v1294, 1.442695
        %v1360 = vpow.pop %v1359
        %v1361 = vmul.f32 %v1295, 1.442695
        %v1362 = vpow.pop %v1361
        %v1363 = vmul.f32 %v1296, 1.442695
        %v1364 = vpow.pop %v1363
        %v1365 = vmul.f32 %v1297, 1.442695
        %v1366 = vpow.pop %v1365
        %v1367 = vmul.f32 %v1298, 1.442695
        %v1368 = vpow.pop %v1367
        %v1369 = vmul.f32 %v1299, 1.442695
        %v1370 = vpow.pop %v1369
        %v1371 = vmul.f32 %v1300, 1.442695
        %v1372 = vpow.pop %v1371
        %v1373 = vmul.f32 %v1301, 1.442695
        %v1374 = vpow.pop %v1373
        %v1375 = vmul.f32 %v1302, 1.442695
        %v1376 = vpow.pop %v1375
        %v1377 = vmul.f32 %v1303, 1.442695
        %v1378 = vpow.pop %v1377
        %v1379 = vmul.f32 %v1304, 1.442695
        %v1380 = vpow.pop %v1379
        %v1381 = vmul.f32 %v1305, 1.442695
        %v1382 = vpow.pop %v1381
        %v1383 = vmul.f32 %v1306, 1.442695
        %v1384 = vpow.pop %v1383
        %v1385 = vmul.f32 %v1307, 1.442695
        %v1386 = vpow.pop %v1385
        %v1387 = vmul.f32 %v1308, 1.442695
        %v1388 = vpow.pop %v1387
        %v1389 = vmul.f32 %v1309, 1.442695
        %v1390 = vpow.pop %v1389
        %v1391 = vmul.f32 %v1310, 1.442695
        %v1392 = vpow.pop %v1391
        %v1393 = vmul.f32 %v1311, 1.442695
        %v1394 = vpow.pop %v1393
        %v1395 = vmul.f32 %v1312, 1.442695
        %v1396 = vpow.pop %v1395
        %v1397 = vmul.f32 %v1313, 1.442695
        %v1398 = vpow.pop %v1397
        %v1399 = vmul.f32 %v1314, 1.442695
        %v1400 = vpow.pop %v1399
        %v1401 = vmul.f32 %v1315, 1.442695
        %v1402 = vpow.pop %v1401
        %v1403 = vmul.f32 %v1316, 1.442695
        %v1404 = vpow.pop %v1403
        %v1405 = vmul.f32 %v1317, 1.442695
        %v1406 = vpow.pop %v1405
        %v1407 = vmul.f32 %v1318, 1.442695
        %v1408 = vpow.pop %v1407
        %v1409 = vmul.f32 %v1319, 1.442695
        %v1410 = vpow.pop %v1409
        %v1411 = vmul.f32 %v1320, 1.442695
        %v1412 = vpow.pop %v1411
        %v1413 = vmul.f32 %v1321, 1.442695
        %v1414 = vpow.pop %v1413
        %v1415 = vmul.f32 %v1322, 1.442695
        %v1416 = vpow.pop %v1415
        %v1417 = vmul.f32 %v1323, 1.442695
        %v1418 = vpow.pop %v1417
        %v1419 = vmul.f32 %v1324, 1.442695
        %v1420 = vpow.pop %v1419
        %v1421 = vadd.f32 %v1326, 1.0
        %v1422 = vadd.f32 %v1328, 1.0
        %v1423 = vadd.f32 %v1330, 1.0
        %v1424 = vadd.f32 %v1332, 1.0
        %v1425 = vadd.f32 %v1334, 1.0
        %v1426 = vadd.f32 %v1336, 1.0
        %v1427 = vadd.f32 %v1338, 1.0
        %v1428 = vadd.f32 %v1340, 1.0
        %v1429 = vadd.f32 %v1342, 1.0
        %v1430 = vadd.f32 %v1344, 1.0
        %v1431 = vadd.f32 %v1346, 1.0
        %v1432 = vadd.f32 %v1348, 1.0
        %v1433 = vadd.f32 %v1350, 1.0
        %v1434 = vadd.f32 %v1352, 1.0
        %v1435 = vadd.f32 %v1354, 1.0
        %v1436 = vadd.f32 %v1356, 1.0
        %v1437 = vadd.f32 %v1358, 1.0
        %v1438 = vadd.f32 %v1360, 1.0
        %v1439 = vadd.f32 %v1362, 1.0
        %v1440 = vadd.f32 %v1364, 1.0
        %v1441 = vadd.f32 %v1366, 1.0
        %v1442 = vadd.f32 %v1368, 1.0
        %v1443 = vadd.f32 %v1370, 1.0
        %v1444 = vadd.f32 %v1372, 1.0
        %v1445 = vadd.f32 %v1374, 1.0
        %v1446 = vadd.f32 %v1376, 1.0
        %v1447 = vadd.f32 %v1378, 1.0
        %v1448 = vadd.f32 %v1380, 1.0
        %v1449 = vadd.f32 %v1382, 1.0
        %v1450 = vadd.f32 %v1384, 1.0
        %v1451 = vadd.f32 %v1386, 1.0
        %v1452 = vadd.f32 %v1388, 1.0
        %v1453 = vadd.f32 %v1390, 1.0
        %v1454 = vadd.f32 %v1392, 1.0
        %v1455 = vadd.f32 %v1394, 1.0
        %v1456 = vadd.f32 %v1396, 1.0
        %v1457 = vadd.f32 %v1398, 1.0
        %v1458 = vadd.f32 %v1400, 1.0
        %v1459 = vadd.f32 %v1402, 1.0
        %v1460 = vadd.f32 %v1404, 1.0
        %v1461 = vadd.f32 %v1406, 1.0
        %v1462 = vadd.f32 %v1408, 1.0
        %v1463 = vadd.f32 %v1410, 1.0
        %v1464 = vadd.f32 %v1412, 1.0
        %v1465 = vadd.f32 %v1414, 1.0
        %v1466 = vadd.f32 %v1416, 1.0
        %v1467 = vadd.f32 %v1418, 1.0
        %v1468 = vadd.f32 %v1420, 1.0
        %v1469 = vrcp.pop %v1421
        %v1470 = vmul.f32 1.0, %v1469
        %v1471 = vrcp.pop %v1422
        %v1472 = vmul.f32 1.0, %v1471
        %v1473 = vrcp.pop %v1423
        %v1474 = vmul.f32 1.0, %v1473
        %v1475 = vrcp.pop %v1424
        %v1476 = vmul.f32 1.0, %v1475
        %v1477 = vrcp.pop %v1425
        %v1478 = vmul.f32 1.0, %v1477
        %v1479 = vrcp.pop %v1426
        %v1480 = vmul.f32 1.0, %v1479
        %v1481 = vrcp.pop %v1427
        %v1482 = vmul.f32 1.0, %v1481
        %v1483 = vrcp.pop %v1428
        %v1484 = vmul.f32 1.0, %v1483
        %v1485 = vrcp.pop %v1429
        %v1486 = vmul.f32 1.0, %v1485
        %v1487 = vrcp.pop %v1430
        %v1488 = vmul.f32 1.0, %v1487
        %v1489 = vrcp.pop %v1431
        %v1490 = vmul.f32 1.0, %v1489
        %v1491 = vrcp.pop %v1432
        %v1492 = vmul.f32 1.0, %v1491
        %v1493 = vrcp.pop %v1433
        %v1494 = vmul.f32 1.0, %v1493
        %v1495 = vrcp.pop %v1434
        %v1496 = vmul.f32 1.0, %v1495
        %v1497 = vrcp.pop %v1435
        %v1498 = vmul.f32 1.0, %v1497
        %v1499 = vrcp.pop %v1436
        %v1500 = vmul.f32 1.0, %v1499
        %v1501 = vrcp.pop %v1437
        %v1502 = vmul.f32 1.0, %v1501
        %v1503 = vrcp.pop %v1438
        %v1504 = vmul.f32 1.0, %v1503
        %v1505 = vrcp.pop %v1439
        %v1506 = vmul.f32 1.0, %v1505
        %v1507 = vrcp.pop %v1440
        %v1508 = vmul.f32 1.0, %v1507
        %v1509 = vrcp.pop %v1441
        %v1510 = vmul.f32 1.0, %v1509
        %v1511 = vrcp.pop %v1442
        %v1512 = vmul.f32 1.0, %v1511
        %v1513 = vrcp.pop %v1443
        %v1514 = vmul.f32 1.0, %v1513
        %v1515 = vrcp.pop %v1444
        %v1516 = vmul.f32 1.0, %v1515
        %v1517 = vrcp.pop %v1445
        %v1518 = vmul.f32 1.0, %v1517
        %v1519 = vrcp.pop %v1446
        %v1520 = vmul.f32 1.0, %v1519
        %v1521 = vrcp.pop %v1447
        %v1522 = vmul.f32 1.0, %v1521
        %v1523 = vrcp.pop %v1448
        %v1524 = vmul.f32 1.0, %v1523
        %v1525 = vrcp.pop %v1449
        %v1526 = vmul.f32 1.0, %v1525
        %v1527 = vrcp.pop %v1450
        %v1528 = vmul.f32 1.0, %v1527
        %v1529 = vrcp.pop %v1451
        %v1530 = vmul.f32 1.0, %v1529
        %v1531 = vrcp.pop %v1452
        %v1532 = vmul.f32 1.0, %v1531
        %v1533 = vrcp.pop %v1453
        %v1534 = vmul.f32 1.0, %v1533
        %v1535 = vrcp.pop %v1454
        %v1536 = vmul.f32 1.0, %v1535
        %v1537 = vrcp.pop %v1455
        %v1538 = vmul.f32 1.0, %v1537
        %v1539 = vrcp.pop %v1456
        %v1540 = vmul.f32 1.0, %v1539
        %v1541 = vrcp.pop %v1457
        %v1542 = vmul.f32 1.0, %v1541
        %v1543 = vrcp.pop %v1458
        %v1544 = vmul.f32 1.0, %v1543
        %v1545 = vrcp.pop %v1459
        %v1546 = vmul.f32 1.0, %v1545
        %v1547 = vrcp.pop %v1460
        %v1548 = vmul.f32 1.0, %v1547
        %v1549 = vrcp.pop %v1461
        %v1550 = vmul.f32 1.0, %v1549
        %v1551 = vrcp.pop %v1462
        %v1552 = vmul.f32 1.0, %v1551
        %v1553 = vrcp.pop %v1463
        %v1554 = vmul.f32 1.0, %v1553
        %v1555 = vrcp.pop %v1464
        %v1556 = vmul.f32 1.0, %v1555
        %v1557 = vrcp.pop %v1465
        %v1558 = vmul.f32 1.0, %v1557
        %v1559 = vrcp.pop %v1466
        %v1560 = vmul.f32 1.0, %v1559
        %v1561 = vrcp.pop %v1467
        %v1562 = vmul.f32 1.0, %v1561
        %v1563 = vrcp.pop %v1468
        %v1564 = vmul.f32 1.0, %v1563
        %v1565 = vadd.f32 %v1470, 1.0
        %v1566 = vadd.f32 %v1472, 1.0
        %v1567 = vadd.f32 %v1474, 1.0
        %v1568 = vadd.f32 %v1476, 1.0
        %v1569 = vadd.f32 %v1478, 1.0
        %v1570 = vadd.f32 %v1480, 1.0
        %v1571 = vadd.f32 %v1482, 1.0
        %v1572 = vadd.f32 %v1484, 1.0
        %v1573 = vadd.f32 %v1486, 1.0
        %v1574 = vadd.f32 %v1488, 1.0
        %v1575 = vadd.f32 %v1490, 1.0
        %v1576 = vadd.f32 %v1492, 1.0
        %v1577 = vadd.f32 %v1494, 1.0
        %v1578 = vadd.f32 %v1496, 1.0
        %v1579 = vadd.f32 %v1498, 1.0
        %v1580 = vadd.f32 %v1500, 1.0
        %v1581 = vadd.f32 %v1502, 1.0
        %v1582 = vadd.f32 %v1504, 1.0
        %v1583 = vadd.f32 %v1506, 1.0
        %v1584 = vadd.f32 %v1508, 1.0
        %v1585 = vadd.f32 %v1510, 1.0
        %v1586 = vadd.f32 %v1512, 1.0
        %v1587 = vadd.f32 %v1514, 1.0
        %v1588 = vadd.f32 %v1516, 1.0
        %v1589 = vadd.f32 %v1518, 1.0
        %v1590 = vadd.f32 %v1520, 1.0
        %v1591 = vadd.f32 %v1522, 1.0
        %v1592 = vadd.f32 %v1524, 1.0
        %v1593 = vadd.f32 %v1526, 1.0
        %v1594 = vadd.f32 %v1528, 1.0
        %v1595 = vadd.f32 %v1530, 1.0
        %v1596 = vadd.f32 %v1532, 1.0
        %v1597 = vadd.f32 %v1534, 1.0
        %v1598 = vadd.f32 %v1536, 1.0
        %v1599 = vadd.f32 %v1538, 1.0
        %v1600 = vadd.f32 %v1540, 1.0
        %v1601 = vadd.f32 %v1542, 1.0
        %v1602 = vadd.f32 %v1544, 1.0
        %v1603 = vadd.f32 %v1546, 1.0
        %v1604 = vadd.f32 %v1548, 1.0
        %v1605 = vadd.f32 %v1550, 1.0
        %v1606 = vadd.f32 %v1552, 1.0
        %v1607 = vadd.f32 %v1554, 1.0
        %v1608 = vadd.f32 %v1556, 1.0
        %v1609 = vadd.f32 %v1558, 1.0
        %v1610 = vadd.f32 %v1560, 1.0
        %v1611 = vadd.f32 %v1562, 1.0
        %v1612 = vadd.f32 %v1564, 1.0
        %v1613 = vmul.f32 %v243, %v1565
        %v1614 = vmul.f32 %v244, %v1566
        %v1615 = vmul.f32 %v245, %v1567
        %v1616 = vmul.f32 %v246, %v1568
        %v1617 = vmul.f32 %v247, %v1569
        %v1618 = vmul.f32 %v248, %v1570
        %v1619 = vmul.f32 %v249, %v1571
        %v1620 = vmul.f32 %v250, %v1572
        %v1621 = vmul.f32 %v251, %v1573
        %v1622 = vmul.f32 %v252, %v1574
        %v1623 = vmul.f32 %v253, %v1575
        %v1624 = vmul.f32 %v254, %v1576
        %v1625 = vmul.f32 %v255, %v1577
        %v1626 = vmul.f32 %v256, %v1578
        %v1627 = vmul.f32 %v257, %v1579
        %v1628 = vmul.f32 %v258, %v1580
        %v1629 = vmul.f32 %v259, %v1581
        %v1630 = vmul.f32 %v260, %v1582
        %v1631 = vmul.f32 %v261, %v1583
        %v1632 = vmul.f32 %v262, %v1584
        %v1633 = vmul.f32 %v263, %v1585
        %v1634 = vmul.f32 %v264, %v1586
        %v1635 = vmul.f32 %v265, %v1587
        %v1636 = vmul.f32 %v266, %v1588
        %v1637 = vmul.f32 %v267, %v1589
        %v1638 = vmul.f32 %v268, %v1590
        %v1639 = vmul.f32 %v269, %v1591
        %v1640 = vmul.f32 %v270, %v1592
        %v1641 = vmul.f32 %v271, %v1593
        %v1642 = vmul.f32 %v272, %v1594
        %v1643 = vmul.f32 %v273, %v1595
        %v1644 = vmul.f32 %v274, %v1596
        %v1645 = vmul.f32 %v275, %v1597
        %v1646 = vmul.f32 %v276, %v1598
        %v1647 = vmul.f32 %v277, %v1599
        %v1648 = vmul.f32 %v278, %v1600
        %v1649 = vmul.f32 %v279, %v1601
        %v1650 = vmul.f32 %v280, %v1602
        %v1651 = vmul.f32 %v281, %v1603
        %v1652 = vmul.f32 %v282, %v1604
        %v1653 = vmul.f32 %v283, %v1605
        %v1654 = vmul.f32 %v284, %v1606
        %v1655 = vmul.f32 %v285, %v1607
        %v1656 = vmul.f32 %v286, %v1608
        %v1657 = vmul.f32 %v287, %v1609
        %v1658 = vmul.f32 %v288, %v1610
        %v1659 = vmul.f32 %v289, %v1611
        %v1660 = vmul.f32 %v290, %v1612
        %1661 = vst [vmem:[%s242] sm:$0xff] %v1613
        %1662 = vst [vmem:[%s242 + $0x8] sm:$0xff] %v1614
        %1663 = vst [vmem:[%s242 + $0x10] sm:$0xff] %v1615
        %1664 = vst [vmem:[%s242 + $0x18] sm:$0xff] %v1616
        %1665 = vst [vmem:[%s242 + $0x20] sm:$0xff] %v1617
        %1666 = vst [vmem:[%s242 + $0x28] sm:$0xff] %v1618
        %1667 = vst [vmem:[%s242 + $0x30] sm:$0xff] %v1619
        %1668 = vst [vmem:[%s242 + $0x38] sm:$0xff] %v1620
        %1669 = vst [vmem:[%s242 + $0x40] sm:$0xff] %v1621
        %1670 = vst [vmem:[%s242 + $0x48] sm:$0xff] %v1622
        %1671 = vst [vmem:[%s242 + $0x50] sm:$0xff] %v1623
        %1672 = vst [vmem:[%s242 + $0x58] sm:$0xff] %v1624
        %1673 = vst [vmem:[%s242 + $0x60] sm:$0xff] %v1625
        %1674 = vst [vmem:[%s242 + $0x68] sm:$0xff] %v1626
        %1675 = vst [vmem:[%s242 + $0x70] sm:$0xff] %v1627
        %1676 = vst [vmem:[%s242 + $0x78] sm:$0xff] %v1628
        %1677 = vst [vmem:[%s242 + $0x80] sm:$0xff] %v1629
        %1678 = vst [vmem:[%s242 + $0x88] sm:$0xff] %v1630
        %1679 = vst [vmem:[%s242 + $0x90] sm:$0xff] %v1631
        %1680 = vst [vmem:[%s242 + $0x98] sm:$0xff] %v1632
        %1681 = vst [vmem:[%s242 + $0xa0] sm:$0xff] %v1633
        %1682 = vst [vmem:[%s242 + $0xa8] sm:$0xff] %v1634
        %1683 = vst [vmem:[%s242 + $0xb0] sm:$0xff] %v1635
        %1684 = vst [vmem:[%s242 + $0xb8] sm:$0xff] %v1636
        %1685 = vst [vmem:[%s242 + $0xc0] sm:$0xff] %v1637
        %1686 = vst [vmem:[%s242 + $0xc8] sm:$0xff] %v1638
        %1687 = vst [vmem:[%s242 + $0xd0] sm:$0xff] %v1639
        %1688 = vst [vmem:[%s242 + $0xd8] sm:$0xff] %v1640
        %1689 = vst [vmem:[%s242 + $0xe0] sm:$0xff] %v1641
        %1690 = vst [vmem:[%s242 + $0xe8] sm:$0xff] %v1642
        %1691 = vst [vmem:[%s242 + $0xf0] sm:$0xff] %v1643
        %1692 = vst [vmem:[%s242 + $0xf8] sm:$0xff] %v1644
        %1693 = vst [vmem:[%s242 + $0x100] sm:$0xff] %v1645
        %1694 = vst [vmem:[%s242 + $0x108] sm:$0xff] %v1646
        %1695 = vst [vmem:[%s242 + $0x110] sm:$0xff] %v1647
        %1696 = vst [vmem:[%s242 + $0x118] sm:$0xff] %v1648
        %1697 = vst [vmem:[%s242 + $0x120] sm:$0xff] %v1649
        %1698 = vst [vmem:[%s242 + $0x128] sm:$0xff] %v1650
        %1699 = vst [vmem:[%s242 + $0x130] sm:$0xff] %v1651
        %1700 = vst [vmem:[%s242 + $0x138] sm:$0xff] %v1652
        %1701 = vst [vmem:[%s242 + $0x140] sm:$0xff] %v1653
        %1702 = vst [vmem:[%s242 + $0x148] sm:$0xff] %v1654
        %1703 = vst [vmem:[%s242 + $0x150] sm:$0xff] %v1655
        %1704 = vst [vmem:[%s242 + $0x158] sm:$0xff] %v1656
        %1705 = vst [vmem:[%s242 + $0x160] sm:$0xff] %v1657
        %1706 = vst [vmem:[%s242 + $0x168] sm:$0xff] %v1658
        %1707 = vst [vmem:[%s242 + $0x170] sm:$0xff] %v1659
        %1708 = vst [vmem:[%s242 + $0x178] sm:$0xff] %v1660
        %s1709 = sand.u32 %s140, 1
        %s1710 = scalar_lea.sflag [#allocation4], %s1709
        %s1711 = sand.u32 %s140, 1
        %s1712 = smul.addr %s1711, 384
        %s1713 = scalar_lea.vmem [#allocation5], %s1712
        // Predicated region
        $region45: #{tpu_custom_call.1} parent=39 // pred_check
          %p1714 = pneg %p150
        $region46: #{tpu_custom_call.1} parent=39 // pred_check_branch
          %1716 = sbr.rel (%p1714) target = $region48
        $region47: #{tpu_custom_call.1} parent=39 // pred_region
          %s1718 = ssub.s32 6144, 6144
          %1719 = vsyncadd %s1710, %s1718
          %s1720 = smul.addr %s22, 48
          %s1721 = smul.addr %s1720, 128
          %s1722 = scalar_lea.hbm %s5, %s1721
          %s1723 = sshll.u32 %s1713, 4
          %s1724 = int_to_ptr.vmem [resolvable:$true] %s1723
          %1729 = dma.vmem_to_hbm [thread:$0]  %s1724, 6144, %s1722, %s1710, 256, 256, 16
        $region48: #{tpu_custom_call.1} parent=39 // pred_fallthru
          _
      $region40: #{tpu_custom_call.1} parent=5 // pred_fallthru
        _
      %p1730 = scmp.le.s32.totalorder 2, %s17
      // Predicated region
      $region49: #{tpu_custom_call.1} parent=5 // pred_check
        %p1731 = pneg %p1730
      $region50: #{tpu_custom_call.1} parent=5 // pred_check_branch
        %1733 = sbr.rel (%p1731) target = $region52
      $region51: #{tpu_custom_call.1} parent=5 // pred_region
        %s1734 = ssub.s32 %s17, 2
        // Predicated region
        $region53: #{tpu_custom_call.1} parent=51 // pred_check
          %p1735 = pneg %p156
        $region54: #{tpu_custom_call.1} parent=51 // pred_check_branch
          %1737 = sbr.rel (%p1735) target = $region56
        $region55: #{tpu_custom_call.1} parent=51 // pred_region
          %s1738 = sand.u32 %s141, 1
          %s1739 = scalar_lea.sflag [#allocation4], %s1738
          %s1740 = sand.u32 %s141, 1
          %s1741 = smul.addr %s1740, 384
          %s1742 = scalar_lea.vmem [#allocation5], %s1741
          %1743 = dma.done %s1739, 6144
        $region56: #{tpu_custom_call.1} parent=51 // pred_fallthru
          _
      $region52: #{tpu_custom_call.1} parent=5 // pred_fallthru
        _
    $region6: #{tpu_custom_call.1} parent=1 // loop_footer
      %s21 = sadd.s32 1, %s17
    $region7: #{tpu_custom_call.1} parent=1 // loop_footer_branch
      %16 = sbr.rel target = $region3
    $region8: #{tpu_custom_call.1} parent=1 // loop_exit
      _
    %1744 = vsyncpa [#allocation3], 1
    %s1745 = scalar_lea.sflag [#allocation3], 1
    %1746 = vsyncpa %s1745, 1
    %1747 = vsyncpa [#allocation4], 1
    %s1748 = scalar_lea.sflag [#allocation4], 1
    %1749 = vsyncpa %s1748, 1

</llo_original>
